<compile_context>
chip_gen: v7x
topology: tpu7x:2x2x1
jax: 0.10.0
libtpu: 0.0.40
codegen_flags: <defaults>
</compile_context>

<pallas_src>
import jax
import jax.numpy as jnp
from jax import lax
from jax.experimental import pallas as pl
from jax.experimental.pallas import tpu as pltpu

BN_EPS = 1e-5
LANE = 128
SUBLANE_BF16 = 16          # bf16 packs 2 rows per 32-bit sublane
NUM_CORES = 2              # leading "parallel" grid axis (megacore shard on v7x)


def _round_up(v, m):
    return ((v + m - 1) // m) * m


def _cdiv(a, b):
    return -(-a // b)


def conv_block_forward(x, w, b, gamma, beta, *, max_tile_m=1024):
    # x: (N, Cin, H, W) f32, w: (Cout, Cin, KH, KW), b/gamma/beta: (Cout,)
    N, Cin, H, W = x.shape
    Cout, _, KH, KW = w.shape
    Ho, Wo = H - KH + 1, W - KW + 1
    # BN batch statistics are recovered from the four 2x2 pool-corner slabs, which
    # cover the full conv output only when Ho and Wo are even (true here).
    # TODO(synk): support odd conv-output sizes (MaxPool drops the trailing row/col
    # but BatchNorm still sees it).
    assert Ho % 2 == 0 and Wo % 2 == 0
    Hp, Wp = Ho // 2, Wo // 2
    M = N * Hp * Wp
    K = KH * KW * Cin

    cout_pad = _round_up(Cout, LANE)
    tile_m = _round_up(min(max_tile_m, _round_up(M, SUBLANE_BF16)), SUBLANE_BF16)
    num_real_tiles = _cdiv(M, tile_m)
    tiles_per_core = _cdiv(num_real_tiles, NUM_CORES)
    total_tiles = tiles_per_core * NUM_CORES
    m_pad = total_tiles * tile_m
    inv_count = 1.0 / float(4 * M)                     # = 1 / (N*Ho*Wo)
    needs_mask = (m_pad != M)

    # ---------------- wrapper-side layout glue (im2col, padding, bf16) ----------------
    # TODO(synk): for production Cin / kernel sizes this im2col slab is ~KH*KW x the
    # raw input bytes; replace with in-kernel shifted matmuls on an NHWC tile.
    x_nhwc = jnp.transpose(x, (0, 2, 3, 1)).astype(jnp.float32)           # (N, H, W, Cin)
    w_mat = jnp.transpose(w, (2, 3, 1, 0)).reshape(K, Cout).astype(jnp.float32)

    corners = []
    for p in range(2):
        for q in range(2):
            taps = [
                x_nhwc[:, p + kh: p + kh + 2 * (Hp - 1) + 1: 2,
                       q + kw: q + kw + 2 * (Wp - 1) + 1: 2, :]
                for kh in range(KH) for kw in range(KW)
            ]
            pat = jnp.stack(taps, axis=3)                                  # (N, Hp, Wp, KH*KW, Cin)
            corners.append(pat.reshape(M, K))
    P = jnp.stack(corners, axis=0)                                         # (4, M, K)
    P = jnp.pad(P, ((0, 0), (0, m_pad - M), (0, 0))).astype(jnp.bfloat16)

    pad_c = ((0, 0), (0, cout_pad - Cout))
    w_bf = jnp.pad(w_mat, pad_c).astype(jnp.bfloat16)                      # (K, cout_pad)
    b2 = jnp.pad(b.reshape(1, Cout).astype(jnp.float32), pad_c)
    g2 = jnp.pad(gamma.reshape(1, Cout).astype(jnp.float32), pad_c)
    bt2 = jnp.pad(beta.reshape(1, Cout).astype(jnp.float32), pad_c)

    # ------- pass 1: conv matmuls + ReLU, sign(gamma)-selected pool extreme, BN sums -------
    def stats_kernel(p_ref, w_ref, b_ref, g_ref, y_ref, st_ref):
        i = pl.program_id(1)

        @pl.when(i == 0)
        def _init():
            st_ref[...] = jnp.zeros_like(st_ref)

        wv = w_ref[...]
        bv = b_ref[...]
        # 4 separate (tile_m, K) x (K, cout_pad) bf16 matmuls, f32 accumulation.
        y0 = jnp.maximum(jnp.dot(p_ref[0], wv, preferred_element_type=jnp.float32) + bv, 0.0)
        y1 = jnp.maximum(jnp.dot(p_ref[1], wv, preferred_element_type=jnp.float32) + bv, 0.0)
        y2 = jnp.maximum(jnp.dot(p_ref[2], wv, preferred_element_type=jnp.float32) + bv, 0.0)
        y3 = jnp.maximum(jnp.dot(p_ref[3], wv, preferred_element_type=jnp.float32) + bv, 0.0)

        # The per-channel BN affine is monotone and its rsqrt factor is > 0, so the
        # surviving pool extreme is known up front from sign(gamma); store one bf16 slab.
        ymax = jnp.maximum(jnp.maximum(y0, y1), jnp.maximum(y2, y3))
        ymin = jnp.minimum(jnp.minimum(y0, y1), jnp.minimum(y2, y3))
        ysel = jnp.where(g_ref[...] >= 0.0, ymax, ymin)
        y_ref[...] = ysel.astype(jnp.bfloat16)

        ysum = (y0 + y1) + (y2 + y3)
        ysq = (y0 * y0 + y1 * y1) + (y2 * y2 + y3 * y3)

        def _accumulate(rows_sum, rows_sq):
            s = jnp.sum(rows_sum, axis=0, keepdims=True)
            ss = jnp.sum(rows_sq, axis=0, keepdims=True)
            st_ref[...] += jnp.concatenate([s, ss], axis=0)[None]

        if needs_mask:
            g_tile = pl.program_id(0) * tiles_per_core + i
            valid = M - g_tile * tile_m

            @pl.when(valid >= tile_m)          # full tile: no masking work
            def _full():
                _accumulate(ysum, ysq)

            @pl.when(valid < tile_m)           # partial / padding tile
            def _partial():
                mask = lax.broadcasted_iota(jnp.int32, (tile_m, 1), 0) < valid
                _accumulate(jnp.where(mask, ysum, 0.0), jnp.where(mask, ysq, 0.0))
        else:
            _accumulate(ysum, ysq)

    mm, stats = pl.pallas_call(
        stats_kernel,
        out_shape=(jax.ShapeDtypeStruct((m_pad, cout_pad), jnp.bfloat16),
                   jax.ShapeDtypeStruct((NUM_CORES, 2, cout_pad), jnp.float32)),
        grid=(NUM_CORES, tiles_per_core),
        in_specs=[
            pl.BlockSpec((4, tile_m, K), lambda c, i: (0, c * tiles_per_core + i, 0)),
            pl.BlockSpec((K, cout_pad), lambda c, i: (0, 0)),
            pl.BlockSpec((1, cout_pad), lambda c, i: (0, 0)),
            pl.BlockSpec((1, cout_pad), lambda c, i: (0, 0)),
        ],
        out_specs=(
            pl.BlockSpec((tile_m, cout_pad), lambda c, i: (c * tiles_per_core + i, 0)),
            pl.BlockSpec((1, 2, cout_pad), lambda c, i: (c, 0, 0)),
        ),
        compiler_params=pltpu.CompilerParams(
            dimension_semantics=("parallel", "arbitrary"),   # core shard x M-tile reduction
            vmem_limit_bytes=32 * 1024 * 1024),
    )(P, w_bf, b2, g2)

    # ---------------- BN finalization hoisted out of the kernels (tiny XLA op) --------
    st = jnp.sum(stats, axis=0)                              # merge per-core partials
    mean = st[0:1, :] * inv_count
    var = jnp.maximum(st[1:2, :] * inv_count - mean * mean, 0.0)   # guard cancellation
    inv = lax.rsqrt(var + BN_EPS) * g2                       # (1, cout_pad)
    shift = bt2 - mean * inv                                 # (1, cout_pad)

    # ---------------- pass 2: single fma, lane-dense f32 store ------------------------
    def apply_kernel(y_ref, inv_ref, shift_ref, o_ref):
        o_ref[...] = y_ref[...].astype(jnp.float32) * inv_ref[...] + shift_ref[...]

    out2d = pl.pallas_call(
        apply_kernel,
        out_shape=jax.ShapeDtypeStruct((m_pad, cout_pad), jnp.float32),
        grid=(total_tiles,),
        in_specs=[
            pl.BlockSpec((tile_m, cout_pad), lambda i: (i, 0)),
            pl.BlockSpec((1, cout_pad), lambda i: (0, 0)),
            pl.BlockSpec((1, cout_pad), lambda i: (0, 0)),
        ],
        out_specs=pl.BlockSpec((tile_m, cout_pad), lambda i: (i, 0)),
        compiler_params=pltpu.CompilerParams(
            dimension_semantics=("parallel",),
            vmem_limit_bytes=32 * 1024 * 1024),
    )(mm, inv, shift)

    out = out2d[:M, :Cout].reshape(N, Hp, Wp, Cout)
    # NCHW to match the PyTorch module; drop this transpose if downstream consumes NHWC.
    return jnp.transpose(out, (0, 3, 1, 2))


def conv_block_reference(x, w, b, gamma, beta):
    # pure-JAX reference mirroring the PyTorch forward (training-mode BN)
    y = lax.conv_general_dilated(x, w, window_strides=(1, 1), padding="VALID",
                                 dimension_numbers=("NCHW", "OIHW", "NCHW"))
    y = jnp.maximum(y + b[None, :, None, None], 0.0)
    mean = jnp.mean(y, axis=(0, 2, 3), keepdims=True)
    var = jnp.var(y, axis=(0, 2, 3), keepdims=True)
    z = (y - mean) * lax.rsqrt(var + BN_EPS)
    z = z * gamma[None, :, None, None] + beta[None, :, None, None]
    N, C, Ho, Wo = z.shape
    return z.reshape(N, C, Ho // 2, 2, Wo // 2, 2).max(axis=(3, 5))


if __name__ == "__main__":
    key = jax.random.PRNGKey(0)
    kx, kw, kb, kg, kbt = jax.random.split(key, 5)

    N, Cin, H, W = 2, 4, 16, 16
    Cout, Ksz = 8, 3

    x = jax.random.normal(kx, (N, Cin, H, W), jnp.float32)
    w = jax.random.normal(kw, (Cout, Cin, Ksz, Ksz), jnp.float32) * 0.1
    b = jax.random.normal(kb, (Cout,), jnp.float32) * 0.1
    # mixed-sign gamma exercises both the max and min pool-extreme branches
    gamma = jax.random.normal(kg, (Cout,), jnp.float32)
    beta = jax.random.normal(kbt, (Cout,), jnp.float32) * 0.1

    fwd = jax.jit(conv_block_forward)
    out = jax.block_until_ready(fwd(x, w, b, gamma, beta))
    assert out.shape == (N, Cout, (H - Ksz + 1) // 2, (W - Ksz + 1) // 2), out.shape

    ref = conv_block_reference(x, w, b, gamma, beta)
    max_err = float(jnp.max(jnp.abs(out - ref)))
    assert bool(jnp.allclose(out, ref, atol=3e-2, rtol=3e-2)), max_err

    print("KERNEL_OK")
</pallas_src>

<mosaic_0001>
module attributes {stable_mosaic.version = 11 : i64} {
  func.func @stats_kernel(%arg0: i32, %arg1: i32, %arg2: memref<4x112x36xbf16, #tpu.memory_space<vmem>>, %arg3: memref<36x128xbf16, #tpu.memory_space<vmem>>, %arg4: memref<1x128xf32, #tpu.memory_space<vmem>>, %arg5: memref<1x128xf32, #tpu.memory_space<vmem>>, %arg6: memref<112x128xbf16, #tpu.memory_space<vmem>>, %arg7: memref<1x2x128xf32, #tpu.memory_space<vmem>>) attributes {dimension_semantics = [#tpu.dimension_semantics<parallel>, #tpu.dimension_semantics<arbitrary>], iteration_bounds = array<i64: 2, 1>, scalar_prefetch = 0 : i64, scratch_operands = 0 : i64, tpu.core_type = #tpu.core_type<tc>, window_params = [{transform_indices = @transform_0, window_bounds = array<i64: 4, 112, 36>}, {pipeline_mode = #tpu.pipeline_mode<synchronous>, transform_indices = @transform_1, window_bounds = array<i64: 36, 128>}, {pipeline_mode = #tpu.pipeline_mode<synchronous>, transform_indices = @transform_2, window_bounds = array<i64: 1, 128>}, {pipeline_mode = #tpu.pipeline_mode<synchronous>, transform_indices = @transform_3, window_bounds = array<i64: 1, 128>}, {transform_indices = @transform_4, window_bounds = array<i64: 112, 128>}, {transform_indices = @transform_5, window_bounds = array<i64: 1, 2, 128>}]} {
    %c0_i32 = arith.constant 0 : i32
    %0 = arith.cmpi eq, %arg1, %c0_i32 : i32
    %1 = arith.extui %0 : i1 to i32
    %c0_i32_0 = arith.constant 0 : i32
    %2 = arith.cmpi ne, %1, %c0_i32_0 : i32
    scf.if %2 {
      %cst_29 = arith.constant 0.000000e+00 : f32
      %67 = vector.broadcast %cst_29 : f32 to vector<1x2x128xf32>
      %c0_30 = arith.constant 0 : index
      %c0_31 = arith.constant 0 : index
      %c0_32 = arith.constant 0 : index
      %68 = vector.load %arg7[%c0_30, %c0_31, %c0_32] : memref<1x2x128xf32, #tpu.memory_space<vmem>>, vector<1x2x128xf32>
      tpu.vector_store %arg7[%c0_30, %c0_31, %c0_32], %67 {strides = array<i32>} : memref<1x2x128xf32, #tpu.memory_space<vmem>>, vector<1x2x128xf32>,
    } else {
    }
    %c0 = arith.constant 0 : index
    %c0_1 = arith.constant 0 : index
    %3 = vector.load %arg3[%c0, %c0_1] : memref<36x128xbf16, #tpu.memory_space<vmem>>, vector<36x128xbf16>
    %c0_2 = arith.constant 0 : index
    %c0_3 = arith.constant 0 : index
    %4 = vector.load %arg4[%c0_2, %c0_3] : memref<1x128xf32, #tpu.memory_space<vmem>>, vector<1x128xf32>
    %c0_4 = arith.constant 0 : index
    %c0_5 = arith.constant 0 : index
    %c0_6 = arith.constant 0 : index
    %5 = vector.load %arg2[%c0_4, %c0_5, %c0_6] : memref<4x112x36xbf16, #tpu.memory_space<vmem>>, vector<1x112x36xbf16>
    %6 = vector.shape_cast %5 : vector<1x112x36xbf16> to vector<112x36xbf16>
    %cst = arith.constant dense<0.000000e+00> : vector<112x128xf32>
    %7 = tpu.matmul %6, %3, %cst {dimension_numbers = #tpu.dot_dimension_numbers<[1], [0], [0], [1], [0, 0, 1, 1], [], []>} : vector<112x36xbf16>, vector<36x128xbf16>, vector<112x128xf32> -> vector<112x128xf32>
    %8 = vector.broadcast %4 : vector<1x128xf32> to vector<112x128xf32>
    %9 = arith.addf %7, %8 : vector<112x128xf32>
    %cst_7 = arith.constant 0.000000e+00 : f32
    %10 = vector.broadcast %cst_7 : f32 to vector<112x128xf32>
    %11 = arith.maximumf %9, %10 : vector<112x128xf32>
    %c1 = arith.constant 1 : index
    %c0_8 = arith.constant 0 : index
    %c0_9 = arith.constant 0 : index
    %12 = vector.load %arg2[%c1, %c0_8, %c0_9] : memref<4x112x36xbf16, #tpu.memory_space<vmem>>, vector<1x112x36xbf16>
    %13 = vector.shape_cast %12 : vector<1x112x36xbf16> to vector<112x36xbf16>
    %cst_10 = arith.constant dense<0.000000e+00> : vector<112x128xf32>
    %14 = tpu.matmul %13, %3, %cst_10 {dimension_numbers = #tpu.dot_dimension_numbers<[1], [0], [0], [1], [0, 0, 1, 1], [], []>} : vector<112x36xbf16>, vector<36x128xbf16>, vector<112x128xf32> -> vector<112x128xf32>
    %15 = vector.broadcast %4 : vector<1x128xf32> to vector<112x128xf32>
    %16 = arith.addf %14, %15 : vector<112x128xf32>
    %cst_11 = arith.constant 0.000000e+00 : f32
    %17 = vector.broadcast %cst_11 : f32 to vector<112x128xf32>
    %18 = arith.maximumf %16, %17 : vector<112x128xf32>
    %c2 = arith.constant 2 : index
    %c0_12 = arith.constant 0 : index
    %c0_13 = arith.constant 0 : index
    %19 = vector.load %arg2[%c2, %c0_12, %c0_13] : memref<4x112x36xbf16, #tpu.memory_space<vmem>>, vector<1x112x36xbf16>
    %20 = vector.shape_cast %19 : vector<1x112x36xbf16> to vector<112x36xbf16>
    %cst_14 = arith.constant dense<0.000000e+00> : vector<112x128xf32>
    %21 = tpu.matmul %20, %3, %cst_14 {dimension_numbers = #tpu.dot_dimension_numbers<[1], [0], [0], [1], [0, 0, 1, 1], [], []>} : vector<112x36xbf16>, vector<36x128xbf16>, vector<112x128xf32> -> vector<112x128xf32>
    %22 = vector.broadcast %4 : vector<1x128xf32> to vector<112x128xf32>
    %23 = arith.addf %21, %22 : vector<112x128xf32>
    %cst_15 = arith.constant 0.000000e+00 : f32
    %24 = vector.broadcast %cst_15 : f32 to vector<112x128xf32>
    %25 = arith.maximumf %23, %24 : vector<112x128xf32>
    %c3 = arith.constant 3 : index
    %c0_16 = arith.constant 0 : index
    %c0_17 = arith.constant 0 : index
    %26 = vector.load %arg2[%c3, %c0_16, %c0_17] : memref<4x112x36xbf16, #tpu.memory_space<vmem>>, vector<1x112x36xbf16>
    %27 = vector.shape_cast %26 : vector<1x112x36xbf16> to vector<112x36xbf16>
    %cst_18 = arith.constant dense<0.000000e+00> : vector<112x128xf32>
    %28 = tpu.matmul %27, %3, %cst_18 {dimension_numbers = #tpu.dot_dimension_numbers<[1], [0], [0], [1], [0, 0, 1, 1], [], []>} : vector<112x36xbf16>, vector<36x128xbf16>, vector<112x128xf32> -> vector<112x128xf32>
    %29 = vector.broadcast %4 : vector<1x128xf32> to vector<112x128xf32>
    %30 = arith.addf %28, %29 : vector<112x128xf32>
    %cst_19 = arith.constant 0.000000e+00 : f32
    %31 = vector.broadcast %cst_19 : f32 to vector<112x128xf32>
    %32 = arith.maximumf %30, %31 : vector<112x128xf32>
    %33 = arith.maximumf %11, %18 : vector<112x128xf32>
    %34 = arith.maximumf %25, %32 : vector<112x128xf32>
    %35 = arith.maximumf %33, %34 : vector<112x128xf32>
    %36 = arith.minimumf %11, %18 : vector<112x128xf32>
    %37 = arith.minimumf %25, %32 : vector<112x128xf32>
    %38 = arith.minimumf %36, %37 : vector<112x128xf32>
    %c0_20 = arith.constant 0 : index
    %c0_21 = arith.constant 0 : index
    %39 = vector.load %arg5[%c0_20, %c0_21] : memref<1x128xf32, #tpu.memory_space<vmem>>, vector<1x128xf32>
    %cst_22 = arith.constant 0.000000e+00 : f32
    %40 = vector.broadcast %cst_22 : f32 to vector<1x128xf32>
    %41 = arith.cmpf oge, %39, %40 : vector<1x128xf32>
    %42 = vector.shape_cast %41 : vector<1x128xi1> to vector<1x128xi1>
    %43 = vector.broadcast %42 : vector<1x128xi1> to vector<112x128xi1>
    %44 = arith.select %43, %35, %38 : vector<112x128xi1>, vector<112x128xf32>
    %45 = arith.truncf %44 : vector<112x128xf32> to vector<112x128xbf16>
    %c0_23 = arith.constant 0 : index
    %c0_24 = arith.constant 0 : index
    %46 = vector.load %arg6[%c0_23, %c0_24] : memref<112x128xbf16, #tpu.memory_space<vmem>>, vector<112x128xbf16>
    tpu.vector_store %arg6[%c0_23, %c0_24], %45 {strides = array<i32>} : memref<112x128xbf16, #tpu.memory_space<vmem>>, vector<112x128xbf16>,
    %47 = arith.addf %11, %18 : vector<112x128xf32>
    %48 = arith.addf %25, %32 : vector<112x128xf32>
    %49 = arith.addf %47, %48 : vector<112x128xf32>
    %50 = arith.mulf %11, %11 : vector<112x128xf32>
    %51 = arith.mulf %18, %18 : vector<112x128xf32>
    %52 = arith.addf %50, %51 : vector<112x128xf32>
    %53 = arith.mulf %25, %25 : vector<112x128xf32>
    %54 = arith.mulf %32, %32 : vector<112x128xf32>
    %55 = arith.addf %53, %54 : vector<112x128xf32>
    %56 = arith.addf %52, %55 : vector<112x128xf32>
    %c1_i32 = arith.constant 1 : i32
    %57 = arith.muli %arg0, %c1_i32 : i32
    %58 = arith.addi %57, %arg1 : i32
    %c112_i32 = arith.constant 112 : i32
    %59 = arith.muli %58, %c112_i32 : i32
    %c98_i32 = arith.constant 98 : i32
    %60 = arith.subi %c98_i32, %59 : i32
    %c112_i32_25 = arith.constant 112 : i32
    %61 = arith.cmpi sge, %60, %c112_i32_25 : i32
    %62 = arith.extui %61 : i1 to i32
    %c0_i32_26 = arith.constant 0 : i32
    %63 = arith.cmpi ne, %62, %c0_i32_26 : i32
    scf.if %63 {
      %cst_29 = arith.constant dense<0.000000e+00> : vector<128xf32>
      %67 = vector.multi_reduction <add>, %49, %cst_29 [0] : vector<112x128xf32> to vector<128xf32>
      %68 = vector.shape_cast %67 : vector<128xf32> to vector<1x128xf32>
      %cst_30 = arith.constant dense<0.000000e+00> : vector<128xf32>
      %69 = vector.multi_reduction <add>, %56, %cst_30 [0] : vector<112x128xf32> to vector<128xf32>
      %70 = vector.shape_cast %69 : vector<128xf32> to vector<1x128xf32>
      %c0_31 = arith.constant 0 : index
      %c0_32 = arith.constant 0 : index
      %c0_33 = arith.constant 0 : index
      %71 = vector.load %arg7[%c0_31, %c0_32, %c0_33] : memref<1x2x128xf32, #tpu.memory_space<vmem>>, vector<1x2x128xf32>
      %72 = tpu.concatenate %68, %70 in 0 : vector<1x128xf32>, vector<1x128xf32> -> vector<2x128xf32>
      %73 = vector.shape_cast %72 : vector<2x128xf32> to vector<1x2x128xf32>
      %74 = arith.addf %71, %73 : vector<1x2x128xf32>
      %c0_34 = arith.constant 0 : index
      %c0_35 = arith.constant 0 : index
      %c0_36 = arith.constant 0 : index
      %75 = vector.load %arg7[%c0_34, %c0_35, %c0_36] : memref<1x2x128xf32, #tpu.memory_space<vmem>>, vector<1x2x128xf32>
      tpu.vector_store %arg7[%c0_34, %c0_35, %c0_36], %74 {strides = array<i32>} : memref<1x2x128xf32, #tpu.memory_space<vmem>>, vector<1x2x128xf32>,
    } else {
    }
    %c112_i32_27 = arith.constant 112 : i32
    %64 = arith.cmpi slt, %60, %c112_i32_27 : i32
    %65 = arith.extui %64 : i1 to i32
    %c0_i32_28 = arith.constant 0 : i32
    %66 = arith.cmpi ne, %65, %c0_i32_28 : i32
    scf.if %66 {
      %67 = tpu.iota {dimensions = array<i32: 0>} : vector<112x1xi32>
      %68 = vector.broadcast %60 : i32 to vector<112x1xi32>
      %69 = arith.cmpi slt, %67, %68 : vector<112x1xi32>
      %cst_29 = arith.constant 0.000000e+00 : f32
      %70 = vector.shape_cast %69 : vector<112x1xi1> to vector<112x1xi1>
      %71 = vector.broadcast %70 : vector<112x1xi1> to vector<112x128xi1>
      %72 = vector.broadcast %cst_29 : f32 to vector<112x128xf32>
      %73 = arith.select %71, %49, %72 : vector<112x128xi1>, vector<112x128xf32>
      %cst_30 = arith.constant 0.000000e+00 : f32
      %74 = vector.shape_cast %69 : vector<112x1xi1> to vector<112x1xi1>
      %75 = vector.broadcast %74 : vector<112x1xi1> to vector<112x128xi1>
      %76 = vector.broadcast %cst_30 : f32 to vector<112x128xf32>
      %77 = arith.select %75, %56, %76 : vector<112x128xi1>, vector<112x128xf32>
      %cst_31 = arith.constant dense<0.000000e+00> : vector<128xf32>
      %78 = vector.multi_reduction <add>, %73, %cst_31 [0] : vector<112x128xf32> to vector<128xf32>
      %79 = vector.shape_cast %78 : vector<128xf32> to vector<1x128xf32>
      %cst_32 = arith.constant dense<0.000000e+00> : vector<128xf32>
      %80 = vector.multi_reduction <add>, %77, %cst_32 [0] : vector<112x128xf32> to vector<128xf32>
      %81 = vector.shape_cast %80 : vector<128xf32> to vector<1x128xf32>
      %c0_33 = arith.constant 0 : index
      %c0_34 = arith.constant 0 : index
      %c0_35 = arith.constant 0 : index
      %82 = vector.load %arg7[%c0_33, %c0_34, %c0_35] : memref<1x2x128xf32, #tpu.memory_space<vmem>>, vector<1x2x128xf32>
      %83 = tpu.concatenate %79, %81 in 0 : vector<1x128xf32>, vector<1x128xf32> -> vector<2x128xf32>
      %84 = vector.shape_cast %83 : vector<2x128xf32> to vector<1x2x128xf32>
      %85 = arith.addf %82, %84 : vector<1x2x128xf32>
      %c0_36 = arith.constant 0 : index
      %c0_37 = arith.constant 0 : index
      %c0_38 = arith.constant 0 : index
      %86 = vector.load %arg7[%c0_36, %c0_37, %c0_38] : memref<1x2x128xf32, #tpu.memory_space<vmem>>, vector<1x2x128xf32>
      tpu.vector_store %arg7[%c0_36, %c0_37, %c0_38], %85 {strides = array<i32>} : memref<1x2x128xf32, #tpu.memory_space<vmem>>, vector<1x2x128xf32>,
    } else {
    }
    return
  }
  func.func @transform_0(%arg0: i32, %arg1: i32) -> (i32, i32, i32) {
    %c1_i32 = arith.constant 1 : i32
    %0 = arith.muli %arg0, %c1_i32 : i32
    %1 = arith.addi %0, %arg1 : i32
    %c0_i32 = arith.constant 0 : i32
    %c0_i32_0 = arith.constant 0 : i32
    %c0_i32_1 = arith.constant 0 : i32
    return %c0_i32, %1, %c0_i32_0 : i32, i32, i32
  }
  func.func @transform_1(%arg0: i32, %arg1: i32) -> (i32, i32) {
    %c0_i32 = arith.constant 0 : i32
    %c0_i32_0 = arith.constant 0 : i32
    %c0_i32_1 = arith.constant 0 : i32
    return %c0_i32, %c0_i32_0 : i32, i32
  }
  func.func @transform_2(%arg0: i32, %arg1: i32) -> (i32, i32) {
    %c0_i32 = arith.constant 0 : i32
    %c0_i32_0 = arith.constant 0 : i32
    %c0_i32_1 = arith.constant 0 : i32
    return %c0_i32, %c0_i32_0 : i32, i32
  }
  func.func @transform_3(%arg0: i32, %arg1: i32) -> (i32, i32) {
    %c0_i32 = arith.constant 0 : i32
    %c0_i32_0 = arith.constant 0 : i32
    %c0_i32_1 = arith.constant 0 : i32
    return %c0_i32, %c0_i32_0 : i32, i32
  }
  func.func @transform_4(%arg0: i32, %arg1: i32) -> (i32, i32) {
    %c1_i32 = arith.constant 1 : i32
    %0 = arith.muli %arg0, %c1_i32 : i32
    %1 = arith.addi %0, %arg1 : i32
    %c0_i32 = arith.constant 0 : i32
    %c0_i32_0 = arith.constant 0 : i32
    return %1, %c0_i32 : i32, i32
  }
  func.func @transform_5(%arg0: i32, %arg1: i32) -> (i32, i32, i32) {
    %c0_i32 = arith.constant 0 : i32
    %c0_i32_0 = arith.constant 0 : i32
    %c0_i32_1 = arith.constant 0 : i32
    return %arg0, %c0_i32, %c0_i32_0 : i32, i32, i32
  }
}

module attributes {stable_mosaic.version = 11 : i64} {
  func.func @apply_kernel(%arg0: i32, %arg1: memref<112x128xbf16, #tpu.memory_space<vmem>>, %arg2: memref<1x128xf32, #tpu.memory_space<vmem>>, %arg3: memref<1x128xf32, #tpu.memory_space<vmem>>, %arg4: memref<112x128xf32, #tpu.memory_space<vmem>>) attributes {dimension_semantics = [#tpu.dimension_semantics<parallel>], iteration_bounds = array<i64: 2>, scalar_prefetch = 0 : i64, scratch_operands = 0 : i64, tpu.core_type = #tpu.core_type<tc>, window_params = [{transform_indices = @transform_0, window_bounds = array<i64: 112, 128>}, {pipeline_mode = #tpu.pipeline_mode<synchronous>, transform_indices = @transform_1, window_bounds = array<i64: 1, 128>}, {pipeline_mode = #tpu.pipeline_mode<synchronous>, transform_indices = @transform_2, window_bounds = array<i64: 1, 128>}, {transform_indices = @transform_3, window_bounds = array<i64: 112, 128>}]} {
    %c0 = arith.constant 0 : index
    %c0_0 = arith.constant 0 : index
    %0 = vector.load %arg1[%c0, %c0_0] : memref<112x128xbf16, #tpu.memory_space<vmem>>, vector<112x128xbf16>
    %1 = arith.extf %0 : vector<112x128xbf16> to vector<112x128xf32>
    %c0_1 = arith.constant 0 : index
    %c0_2 = arith.constant 0 : index
    %2 = vector.load %arg2[%c0_1, %c0_2] : memref<1x128xf32, #tpu.memory_space<vmem>>, vector<1x128xf32>
    %3 = vector.broadcast %2 : vector<1x128xf32> to vector<112x128xf32>
    %4 = arith.mulf %1, %3 : vector<112x128xf32>
    %c0_3 = arith.constant 0 : index
    %c0_4 = arith.constant 0 : index
    %5 = vector.load %arg3[%c0_3, %c0_4] : memref<1x128xf32, #tpu.memory_space<vmem>>, vector<1x128xf32>
    %6 = vector.broadcast %5 : vector<1x128xf32> to vector<112x128xf32>
    %7 = arith.addf %4, %6 : vector<112x128xf32>
    %c0_5 = arith.constant 0 : index
    %c0_6 = arith.constant 0 : index
    %8 = vector.load %arg4[%c0_5, %c0_6] : memref<112x128xf32, #tpu.memory_space<vmem>>, vector<112x128xf32>
    tpu.vector_store %arg4[%c0_5, %c0_6], %7 {strides = array<i32>} : memref<112x128xf32, #tpu.memory_space<vmem>>, vector<112x128xf32>,
    return
  }
  func.func @transform_0(%arg0: i32) -> (i32, i32) {
    %c0_i32 = arith.constant 0 : i32
    %c0_i32_0 = arith.constant 0 : i32
    return %arg0, %c0_i32 : i32, i32
  }
  func.func @transform_1(%arg0: i32) -> (i32, i32) {
    %c0_i32 = arith.constant 0 : i32
    %c0_i32_0 = arith.constant 0 : i32
    %c0_i32_1 = arith.constant 0 : i32
    return %c0_i32, %c0_i32_0 : i32, i32
  }
  func.func @transform_2(%arg0: i32) -> (i32, i32) {
    %c0_i32 = arith.constant 0 : i32
    %c0_i32_0 = arith.constant 0 : i32
    %c0_i32_1 = arith.constant 0 : i32
    return %c0_i32, %c0_i32_0 : i32, i32
  }
  func.func @transform_3(%arg0: i32) -> (i32, i32) {
    %c0_i32 = arith.constant 0 : i32
    %c0_i32_0 = arith.constant 0 : i32
    return %arg0, %c0_i32 : i32, i32
  }
}

</mosaic_0001>

<llo_original>
// kernel: conv_block_forward.3
$region0: #{conv_block_forward.3}
  #allocation0 [shape = 'u32[]', space=smem, size = 0x4, offset = 0x4, fixed_abs, tag = 'smem constant byte address 0x4 - core index']
  #allocation1 [shape = 'u32[144,128]{1,0:T(1,128)}', space=vmem, size = 0x12000, scoped, tag = 'internal scratch']
  %s0 = inlined_call_operand.vmem [shape: bf16[224,128], index: 0, kind: input, shape index: {}]
  %s1 = inlined_call_operand.vmem [shape: f32[1,128], index: 1, kind: input, shape index: {}]
  %s2 = inlined_call_operand.vmem [shape: f32[1,128], index: 2, kind: input, shape index: {}]
  %s3 = inlined_call_operand.vmem [shape: f32[224,128], index: 3, kind: output, shape index: {}]
  %s4 = sld [smem:[#allocation0]]
  $region45: #{conv_block_forward.3} parent=0
    _
  %s6 = ssub.s32 1, %s4
  %s7 = scalar_select 0, %s6, %s4
  loop: start=0, step=1, limit=4
  $region2: #{conv_block_forward.3} parent=0 // loop_pre_header
    _
  $region3: #{conv_block_forward.3} parent=0 // loop_header
    %s9 = sphi 0, %s13
    %p10 = scmp.ge.s32.totalorder %s9, 4
    %s19 = sphi 0, %s21
    %s22 = sphi 0, %s19
    %s23 = sphi 0, %s22
    %s39 = sphi 0, %s23
    %s43 = sphi 0, %s43
    %s45 = sphi 0, %s43
    %s46 = sphi 0, %s45
    %s60 = sphi 0, %s46
    %s64 = sphi 0, %s64
    %s66 = sphi 0, %s64
    %s67 = sphi 0, %s66
    %s81 = sphi 0, %s67
    %s87 = sphi 0, %s89
    %s90 = sphi 0, %s87
    %s91 = sphi 0, %s90
    %s107 = sphi 0, %s91
  $region4: #{conv_block_forward.3} parent=0 // loop_header_branch
    %12 = sbr.rel (%p10) target = $region8
  $region5: #{conv_block_forward.3} parent=0 // loop_body
    %s14 = ssub.s32 %s9, 1
    %s15 = ssub.s32 %s9, 2
    %s16 = sadd.s32 %s9, 1
    %s17 = ssub.s32 %s9, %s16
    %p18 = scmp.eq.s32.totalorder %s17, 0
    %s20 = sadd.s32 %s19, 1
    %s21 = scalar_select %p18, %s19, %s20
    %p24 = pneg %p18
    %p25 = scmp.eq.s32.totalorder %s9, 1
    %p26 = por %p24, %p25
    %p27 = scmp.ne.s32.totalorder %s19, %s22
    %p28 = scmp.eq.s32.totalorder %s9, 0
    %p29 = por %p27, %p28
    %p30 = scmp.ne.s32.totalorder %s19, %s22
    %p31 = scmp.eq.s32.totalorder %s14, 1
    %p32 = por %p30, %p31
    %p33 = scmp.ne.s32.totalorder %s22, %s23
    %p34 = scmp.eq.s32.totalorder %s14, 0
    %p35 = por %p33, %p34
    %p36 = scmp.ne.s32.totalorder %s22, %s23
    %p37 = scmp.eq.s32.totalorder %s15, 1
    %p38 = por %p36, %p37
    %p40 = scmp.ne.s32.totalorder %s23, %s39
    %p41 = scmp.eq.s32.totalorder %s15, 0
    %p42 = por %p40, %p41
    %s44 = sadd.s32 %s43, 1
    %p47 = scmp.eq.s32.totalorder %s9, 1
    %p48 = scmp.ne.s32.totalorder %s43, %s45
    %p49 = scmp.eq.s32.totalorder %s9, 0
    %p50 = por %p48, %p49
    %p51 = scmp.ne.s32.totalorder %s43, %s45
    %p52 = scmp.eq.s32.totalorder %s14, 1
    %p53 = por %p51, %p52
    %p54 = scmp.ne.s32.totalorder %s45, %s46
    %p55 = scmp.eq.s32.totalorder %s14, 0
    %p56 = por %p54, %p55
    %p57 = scmp.ne.s32.totalorder %s45, %s46
    %p58 = scmp.eq.s32.totalorder %s15, 1
    %p59 = por %p57, %p58
    %p61 = scmp.ne.s32.totalorder %s46, %s60
    %p62 = scmp.eq.s32.totalorder %s15, 0
    %p63 = por %p61, %p62
    %s65 = sadd.s32 %s64, 1
    %p68 = scmp.eq.s32.totalorder %s9, 1
    %p69 = scmp.ne.s32.totalorder %s64, %s66
    %p70 = scmp.eq.s32.totalorder %s9, 0
    %p71 = por %p69, %p70
    %p72 = scmp.ne.s32.totalorder %s64, %s66
    %p73 = scmp.eq.s32.totalorder %s14, 1
    %p74 = por %p72, %p73
    %p75 = scmp.ne.s32.totalorder %s66, %s67
    %p76 = scmp.eq.s32.totalorder %s14, 0
    %p77 = por %p75, %p76
    %p78 = scmp.ne.s32.totalorder %s66, %s67
    %p79 = scmp.eq.s32.totalorder %s15, 1
    %p80 = por %p78, %p79
    %p82 = scmp.ne.s32.totalorder %s67, %s81
    %p83 = scmp.eq.s32.totalorder %s15, 0
    %p84 = por %p82, %p83
    %s85 = ssub.s32 %s9, %s16
    %p86 = scmp.eq.s32.totalorder %s85, 0
    %s88 = sadd.s32 %s87, 1
    %s89 = scalar_select %p86, %s87, %s88
    %p92 = pneg %p86
    %p93 = scmp.eq.s32.totalorder %s9, 1
    %p94 = por %p92, %p93
    %p95 = scmp.ne.s32.totalorder %s87, %s90
    %p96 = scmp.eq.s32.totalorder %s9, 0
    %p97 = por %p95, %p96
    %p98 = scmp.ne.s32.totalorder %s87, %s90
    %p99 = scmp.eq.s32.totalorder %s14, 1
    %p100 = por %p98, %p99
    %p101 = scmp.ne.s32.totalorder %s90, %s91
    %p102 = scmp.eq.s32.totalorder %s14, 0
    %p103 = por %p101, %p102
    %p104 = scmp.ne.s32.totalorder %s90, %s91
    %p105 = scmp.eq.s32.totalorder %s15, 1
    %p106 = por %p104, %p105
    %p108 = scmp.ne.s32.totalorder %s91, %s107
    %p109 = scmp.eq.s32.totalorder %s15, 0
    %p110 = por %p108, %p109
    %p111 = scmp.le.s32.totalorder 1, %s9
    %p112 = scmp.lt.s32.totalorder %s9, 3
    %p113 = pnand %p111, %p112
    %p114 = pneg %p113
    // Predicated region
    $region9: #{conv_block_forward.3} parent=5 // pred_check
      _
    $region10: #{conv_block_forward.3} parent=5 // pred_check_branch
      %116 = sbr.rel (%p113) target = $region12
    $region11: #{conv_block_forward.3} parent=5 // pred_region
      %s117 = ssub.s32 %s9, 1
      // Predicated region
      $region13: #{conv_block_forward.3} parent=11 // pred_check
        %p118 = pneg %p56
      $region14: #{conv_block_forward.3} parent=11 // pred_check_branch
        %120 = sbr.rel (%p118) target = $region16
      $region15: #{conv_block_forward.3} parent=11 // pred_region
        _
      $region16: #{conv_block_forward.3} parent=11 // pred_fallthru
        _
      // Predicated region
      $region17: #{conv_block_forward.3} parent=11 // pred_check
        %p121 = pneg %p77
      $region18: #{conv_block_forward.3} parent=11 // pred_check_branch
        %123 = sbr.rel (%p121) target = $region20
      $region19: #{conv_block_forward.3} parent=11 // pred_region
        _
      $region20: #{conv_block_forward.3} parent=11 // pred_fallthru
        _
    $region12: #{conv_block_forward.3} parent=5 // pred_fallthru
      _
    %p124 = scmp.lt.s32.totalorder %s9, 2
    // Predicated region
    $region21: #{conv_block_forward.3} parent=5 // pred_check
      %p125 = pneg %p124
    $region22: #{conv_block_forward.3} parent=5 // pred_check_branch
      %127 = sbr.rel (%p125) target = $region24
    $region23: #{conv_block_forward.3} parent=5 // pred_region
      // Predicated region
      $region25: #{conv_block_forward.3} parent=23 // pred_check
        %p128 = pneg %p29
      $region26: #{conv_block_forward.3} parent=23 // pred_check_branch
        %130 = sbr.rel (%p128) target = $region28
      $region27: #{conv_block_forward.3} parent=23 // pred_region
        %s131 = smul.u32 14, %s9
        %p132 = scmp.lt.s32.totalorder %s131, 27
        %s133 = scalar_select %p132, %s131, 27
        %s134 = smul.addr %s133, 4
        %s135 = scalar_lea.vmem %s0, %s134
        %s136 = smul.u32 14, %s9
      $region28: #{conv_block_forward.3} parent=23 // pred_fallthru
        _
    $region24: #{conv_block_forward.3} parent=5 // pred_fallthru
      _
    %p137 = scmp.le.s32.totalorder 1, %s9
    %p138 = scmp.lt.s32.totalorder %s9, 3
    %p139 = pnand %p137, %p138
    %p140 = pneg %p139
    // Predicated region
    $region29: #{conv_block_forward.3} parent=5 // pred_check
      _
    $region30: #{conv_block_forward.3} parent=5 // pred_check_branch
      %142 = sbr.rel (%p139) target = $region32
    $region31: #{conv_block_forward.3} parent=5 // pred_region
      %s143 = ssub.s32 %s9, 1
      %s144 = smul.u32 14, %s14
      %p145 = scmp.lt.s32.totalorder %s144, 27
      %s146 = scalar_select %p145, %s144, 27
      %s147 = smul.addr %s146, 4
      %s148 = scalar_lea.vmem %s0, %s147
      %p149 = pneg %p35
      %p150 = pneg %p32
      %p151 = pneg %p56
      %p152 = pneg %p53
      %p153 = pneg %p77
      %p154 = pneg %p74
      %p155 = pneg %p103
      %p156 = pneg %p100
      %s157 = smul.u32 14, %s14
      %p158 = scmp.lt.s32.totalorder %s157, 27
      %s159 = scalar_select %p158, %s157, 27
      %s160 = smul.addr %s159, 8
      %s161 = scalar_lea.vmem %s3, %s160
      %s162 = smul.u32 14, %s14
      %p163 = scmp.lt.s32.totalorder %s162, 27
      %s164 = scalar_select %p163, %s162, 27
      %s165 = smul.addr %s164, 4
      %s166 = scalar_lea.vmem %s0, %s165
      %s167 = smul.u32 14, %s14
      %s168 = smul.u32 14, %s14
      %p169 = scmp.lt.s32.totalorder %s168, 27
      %s170 = scalar_select %p169, %s168, 27
      %s171 = smul.addr %s170, 8
      %s172 = scalar_lea.vmem %s3, %s171
      %s173 = smul.u32 14, %s14
      %v174 = vld [vmem:[%s166] sm:$0xf]
      %v175 = vld [vmem:[%s166 + $0x4] sm:$0xf]
      %v176 = vld [vmem:[%s166 + $0x8] sm:$0xf]
      %v177 = vld [vmem:[%s166 + $0xc] sm:$0xf]
      %v178 = vld [vmem:[%s166 + $0x10] sm:$0xf]
      %v179 = vld [vmem:[%s166 + $0x14] sm:$0xf]
      %v180 = vld [vmem:[%s166 + $0x18] sm:$0xf]
      %v181 = vld [vmem:[%s166 + $0x1c] sm:$0xf]
      %v182 = vld [vmem:[%s166 + $0x20] sm:$0xf]
      %v183 = vld [vmem:[%s166 + $0x24] sm:$0xf]
      %v184 = vld [vmem:[%s166 + $0x28] sm:$0xf]
      %v185 = vld [vmem:[%s166 + $0x2c] sm:$0xf]
      %v186 = vld [vmem:[%s166 + $0x30] sm:$0xf]
      %v187 = vld [vmem:[%s166 + $0x34] sm:$0xf]
      %v188 = vunpack.c.l.bf16 %v174
      %v189 = vunpack.c.l.bf16 %v175
      %v190 = vunpack.c.l.bf16 %v176
      %v191 = vunpack.c.l.bf16 %v177
      %v192 = vunpack.c.l.bf16 %v178
      %v193 = vunpack.c.l.bf16 %v179
      %v194 = vunpack.c.l.bf16 %v180
      %v195 = vunpack.c.l.bf16 %v181
      %v196 = vunpack.c.l.bf16 %v182
      %v197 = vunpack.c.l.bf16 %v183
      %v198 = vunpack.c.l.bf16 %v184
      %v199 = vunpack.c.l.bf16 %v185
      %v200 = vunpack.c.l.bf16 %v186
      %v201 = vunpack.c.l.bf16 %v187
      %v202 = vld [vmem:[%s1] sm:$0x1]
      %v204 = vlaneseq
      %v205 = vshrl.u32 %v204, 7
      %v206 = vsub.s32 0, %v205
      %v207 = vrot.slane %v202, %v206
      %v209 = vmul.f32 %v188, %v207
      %v210 = vmul.f32 %v189, %v207
      %v211 = vmul.f32 %v190, %v207
      %v212 = vmul.f32 %v191, %v207
      %v213 = vmul.f32 %v192, %v207
      %v214 = vmul.f32 %v193, %v207
      %v215 = vmul.f32 %v194, %v207
      %v216 = vmul.f32 %v195, %v207
      %v217 = vmul.f32 %v196, %v207
      %v218 = vmul.f32 %v197, %v207
      %v219 = vmul.f32 %v198, %v207
      %v220 = vmul.f32 %v199, %v207
      %v221 = vmul.f32 %v200, %v207
      %v222 = vmul.f32 %v201, %v207
      %v223 = vld [vmem:[%s2] sm:$0x1]
      %v225 = vlaneseq
      %v226 = vshrl.u32 %v225, 7
      %v227 = vsub.s32 0, %v226
      %v228 = vrot.slane %v223, %v227
      %v230 = vadd.f32 %v209, %v228
      %v231 = vadd.f32 %v210, %v228
      %v232 = vadd.f32 %v211, %v228
      %v233 = vadd.f32 %v212, %v228
      %v234 = vadd.f32 %v213, %v228
      %v235 = vadd.f32 %v214, %v228
      %v236 = vadd.f32 %v215, %v228
      %v237 = vadd.f32 %v216, %v228
      %v238 = vadd.f32 %v217, %v228
      %v239 = vadd.f32 %v218, %v228
      %v240 = vadd.f32 %v219, %v228
      %v241 = vadd.f32 %v220, %v228
      %v242 = vadd.f32 %v221, %v228
      %v243 = vadd.f32 %v222, %v228
      %244 = vst [vmem:[%s172] sm:$0xff] %v230
      %245 = vst [vmem:[%s172 + $0x8] sm:$0xff] %v231
      %246 = vst [vmem:[%s172 + $0x10] sm:$0xff] %v232
      %247 = vst [vmem:[%s172 + $0x18] sm:$0xff] %v233
      %248 = vst [vmem:[%s172 + $0x20] sm:$0xff] %v234
      %249 = vst [vmem:[%s172 + $0x28] sm:$0xff] %v235
      %250 = vst [vmem:[%s172 + $0x30] sm:$0xff] %v236
      %251 = vst [vmem:[%s172 + $0x38] sm:$0xff] %v237
      %252 = vst [vmem:[%s172 + $0x40] sm:$0xff] %v238
      %253 = vst [vmem:[%s172 + $0x48] sm:$0xff] %v239
      %254 = vst [vmem:[%s172 + $0x50] sm:$0xff] %v240
      %255 = vst [vmem:[%s172 + $0x58] sm:$0xff] %v241
      %256 = vst [vmem:[%s172 + $0x60] sm:$0xff] %v242
      %257 = vst [vmem:[%s172 + $0x68] sm:$0xff] %v243
      %s258 = smul.u32 14, %s14
      %p259 = scmp.lt.s32.totalorder %s258, 27
      %s260 = scalar_select %p259, %s258, 27
      %s261 = smul.addr %s260, 8
      %s262 = scalar_lea.vmem %s3, %s261
      // Predicated region
      $region33: #{conv_block_forward.3} parent=31 // pred_check
        %p263 = pneg %p100
      $region34: #{conv_block_forward.3} parent=31 // pred_check_branch
        %265 = sbr.rel (%p263) target = $region36
      $region35: #{conv_block_forward.3} parent=31 // pred_region
        %s266 = smul.u32 14, %s14
      $region36: #{conv_block_forward.3} parent=31 // pred_fallthru
        _
    $region32: #{conv_block_forward.3} parent=5 // pred_fallthru
      _
    %p267 = scmp.le.s32.totalorder 2, %s9
    // Predicated region
    $region37: #{conv_block_forward.3} parent=5 // pred_check
      %p268 = pneg %p267
    $region38: #{conv_block_forward.3} parent=5 // pred_check_branch
      %270 = sbr.rel (%p268) target = $region40
    $region39: #{conv_block_forward.3} parent=5 // pred_region
      %s271 = ssub.s32 %s9, 2
      // Predicated region
      $region41: #{conv_block_forward.3} parent=39 // pred_check
        %p272 = pneg %p106
      $region42: #{conv_block_forward.3} parent=39 // pred_check_branch
        %274 = sbr.rel (%p272) target = $region44
      $region43: #{conv_block_forward.3} parent=39 // pred_region
        %s275 = smul.u32 14, %s15
        %p276 = scmp.lt.s32.totalorder %s275, 27
        %s277 = scalar_select %p276, %s275, 27
        %s278 = smul.addr %s277, 8
        %s279 = scalar_lea.vmem %s3, %s278
      $region44: #{conv_block_forward.3} parent=39 // pred_fallthru
        _
    $region40: #{conv_block_forward.3} parent=5 // pred_fallthru
      _
  $region6: #{conv_block_forward.3} parent=0 // loop_footer
    %s13 = sadd.s32 1, %s9
  $region7: #{conv_block_forward.3} parent=0 // loop_footer_branch
    %8 = sbr.rel target = $region3
  $region8: #{conv_block_forward.3} parent=0 // loop_exit
    _

// kernel: conv_block_forward.2
$region0: #{conv_block_forward.2}
  #allocation0 [shape = 'u32[]', space=smem, size = 0x4, offset = 0x4, fixed_abs, tag = 'smem constant byte address 0x4 - core index']
  #allocation1 [shape = 'u32[144,128]{1,0:T(1,128)}', space=vmem, size = 0x12000, scoped, tag = 'internal scratch']
  %s0 = inlined_call_operand.vmem [shape: bf16[4,224,36], index: 0, kind: input, shape index: {}]
  %s1 = inlined_call_operand.vmem [shape: bf16[36,128], index: 1, kind: input, shape index: {}]
  %s2 = inlined_call_operand.vmem [shape: f32[1,128], index: 2, kind: input, shape index: {}]
  %s3 = inlined_call_operand.vmem [shape: f32[1,128], index: 3, kind: input, shape index: {}]
  %s4 = inlined_call_operand.vmem [shape: bf16[224,128], index: 4, kind: output, shape index: {0}]
  %s5 = inlined_call_operand.vmem [shape: f32[2,2,128], index: 5, kind: output, shape index: {1}]
  %6 = xla_tuple %s4, %s5
  %s7 = sld [smem:[#allocation0]]
  $region110: #{conv_block_forward.2} parent=0
    _
  %s9 = ssub.s32 1, %s7
  %s10 = scalar_select 0, %s9, %s7
  $region1: #{conv_block_forward.2} parent=0
    #allocation2 [shape = 'u8[229376]{0}', space=vmem, size = 0x38000, scoped, tag = 'input window, operand 0']
    loop: start=0, step=1, limit=4
    $region2: #{conv_block_forward.2} parent=1 // loop_pre_header
      _
    $region3: #{conv_block_forward.2} parent=1 // loop_header
      %s12 = sphi 0, %s16
      %p13 = scmp.ge.s32.totalorder %s12, 4
      %s19 = sphi 0, %s31
      %s20 = sphi 0, %s27
      %s21 = sphi 0, %s19
      %s22 = sphi 0, %s20
      %s23 = sphi 0, %s21
      %s24 = sphi 0, %s22
      %s36 = sphi 0, %s38
      %s39 = sphi 0, %s36
      %s40 = sphi 0, %s39
      %s56 = sphi 0, %s40
      %s60 = sphi 0, %s60
      %s62 = sphi 0, %s60
      %s63 = sphi 0, %s62
      %s77 = sphi 0, %s63
      %s81 = sphi 0, %s81
      %s83 = sphi 0, %s81
      %s84 = sphi 0, %s83
      %s98 = sphi 0, %s84
      %s102 = sphi 0, %s102
      %s104 = sphi 0, %s102
      %s105 = sphi 0, %s104
      %s119 = sphi 0, %s105
      %s127 = sphi 0, %s129
      %s130 = sphi 0, %s127
      %s131 = sphi 0, %s130
      %s147 = sphi 0, %s131
      %s153 = sphi 0, %s155
      %s156 = sphi 0, %s153
      %s157 = sphi 0, %s156
      %s173 = sphi 0, %s157
    $region4: #{conv_block_forward.2} parent=1 // loop_header_branch
      %15 = sbr.rel (%p13) target = $region8
    $region5: #{conv_block_forward.2} parent=1 // loop_body
      %s17 = ssub.s32 %s12, 1
      %s18 = ssub.s32 %s12, 2
      %s25 = sadd.s32 1, %s20
      %p26 = scmp.ge.s32.totalorder %s25, 1
      %s27 = scalar_select %p26, 0, %s25
      %s28 = sadd.s32 1, %s19
      %s29 = scalar_select %p26, %s28, %s19
      %p30 = scmp.ge.s32.totalorder %s29, 2
      %s31 = scalar_select %p30, 0, %s29
      %s32 = sadd.s32 %s19, %s20
      %s33 = sadd.s32 %s31, %s27
      %s34 = ssub.s32 %s32, %s33
      %p35 = scmp.eq.s32.totalorder %s34, 0
      %s37 = sadd.s32 %s36, 1
      %s38 = scalar_select %p35, %s36, %s37
      %p41 = pneg %p35
      %p42 = scmp.eq.s32.totalorder %s12, 1
      %p43 = por %p41, %p42
      %p44 = scmp.ne.s32.totalorder %s36, %s39
      %p45 = scmp.eq.s32.totalorder %s12, 0
      %p46 = por %p44, %p45
      %p47 = scmp.ne.s32.totalorder %s36, %s39
      %p48 = scmp.eq.s32.totalorder %s17, 1
      %p49 = por %p47, %p48
      %p50 = scmp.ne.s32.totalorder %s39, %s40
      %p51 = scmp.eq.s32.totalorder %s17, 0
      %p52 = por %p50, %p51
      %p53 = scmp.ne.s32.totalorder %s39, %s40
      %p54 = scmp.eq.s32.totalorder %s18, 1
      %p55 = por %p53, %p54
      %p57 = scmp.ne.s32.totalorder %s40, %s56
      %p58 = scmp.eq.s32.totalorder %s18, 0
      %p59 = por %p57, %p58
      %s61 = sadd.s32 %s60, 1
      %p64 = scmp.eq.s32.totalorder %s12, 1
      %p65 = scmp.ne.s32.totalorder %s60, %s62
      %p66 = scmp.eq.s32.totalorder %s12, 0
      %p67 = por %p65, %p66
      %p68 = scmp.ne.s32.totalorder %s60, %s62
      %p69 = scmp.eq.s32.totalorder %s17, 1
      %p70 = por %p68, %p69
      %p71 = scmp.ne.s32.totalorder %s62, %s63
      %p72 = scmp.eq.s32.totalorder %s17, 0
      %p73 = por %p71, %p72
      %p74 = scmp.ne.s32.totalorder %s62, %s63
      %p75 = scmp.eq.s32.totalorder %s18, 1
      %p76 = por %p74, %p75
      %p78 = scmp.ne.s32.totalorder %s63, %s77
      %p79 = scmp.eq.s32.totalorder %s18, 0
      %p80 = por %p78, %p79
      %s82 = sadd.s32 %s81, 1
      %p85 = scmp.eq.s32.totalorder %s12, 1
      %p86 = scmp.ne.s32.totalorder %s81, %s83
      %p87 = scmp.eq.s32.totalorder %s12, 0
      %p88 = por %p86, %p87
      %p89 = scmp.ne.s32.totalorder %s81, %s83
      %p90 = scmp.eq.s32.totalorder %s17, 1
      %p91 = por %p89, %p90
      %p92 = scmp.ne.s32.totalorder %s83, %s84
      %p93 = scmp.eq.s32.totalorder %s17, 0
      %p94 = por %p92, %p93
      %p95 = scmp.ne.s32.totalorder %s83, %s84
      %p96 = scmp.eq.s32.totalorder %s18, 1
      %p97 = por %p95, %p96
      %p99 = scmp.ne.s32.totalorder %s84, %s98
      %p100 = scmp.eq.s32.totalorder %s18, 0
      %p101 = por %p99, %p100
      %s103 = sadd.s32 %s102, 1
      %p106 = scmp.eq.s32.totalorder %s12, 1
      %p107 = scmp.ne.s32.totalorder %s102, %s104
      %p108 = scmp.eq.s32.totalorder %s12, 0
      %p109 = por %p107, %p108
      %p110 = scmp.ne.s32.totalorder %s102, %s104
      %p111 = scmp.eq.s32.totalorder %s17, 1
      %p112 = por %p110, %p111
      %p113 = scmp.ne.s32.totalorder %s104, %s105
      %p114 = scmp.eq.s32.totalorder %s17, 0
      %p115 = por %p113, %p114
      %p116 = scmp.ne.s32.totalorder %s104, %s105
      %p117 = scmp.eq.s32.totalorder %s18, 1
      %p118 = por %p116, %p117
      %p120 = scmp.ne.s32.totalorder %s105, %s119
      %p121 = scmp.eq.s32.totalorder %s18, 0
      %p122 = por %p120, %p121
      %s123 = sadd.s32 %s19, %s20
      %s124 = sadd.s32 %s31, %s27
      %s125 = ssub.s32 %s123, %s124
      %p126 = scmp.eq.s32.totalorder %s125, 0
      %s128 = sadd.s32 %s127, 1
      %s129 = scalar_select %p126, %s127, %s128
      %p132 = pneg %p126
      %p133 = scmp.eq.s32.totalorder %s12, 1
      %p134 = por %p132, %p133
      %p135 = scmp.ne.s32.totalorder %s127, %s130
      %p136 = scmp.eq.s32.totalorder %s12, 0
      %p137 = por %p135, %p136
      %p138 = scmp.ne.s32.totalorder %s127, %s130
      %p139 = scmp.eq.s32.totalorder %s17, 1
      %p140 = por %p138, %p139
      %p141 = scmp.ne.s32.totalorder %s130, %s131
      %p142 = scmp.eq.s32.totalorder %s17, 0
      %p143 = por %p141, %p142
      %p144 = scmp.ne.s32.totalorder %s130, %s131
      %p145 = scmp.eq.s32.totalorder %s18, 1
      %p146 = por %p144, %p145
      %p148 = scmp.ne.s32.totalorder %s131, %s147
      %p149 = scmp.eq.s32.totalorder %s18, 0
      %p150 = por %p148, %p149
      %s151 = ssub.s32 %s19, %s31
      %p152 = scmp.eq.s32.totalorder %s151, 0
      %s154 = sadd.s32 %s153, 1
      %s155 = scalar_select %p152, %s153, %s154
      %p158 = pneg %p152
      %p159 = scmp.eq.s32.totalorder %s12, 1
      %p160 = por %p158, %p159
      %p161 = scmp.ne.s32.totalorder %s153, %s156
      %p162 = scmp.eq.s32.totalorder %s12, 0
      %p163 = por %p161, %p162
      %p164 = scmp.ne.s32.totalorder %s153, %s156
      %p165 = scmp.eq.s32.totalorder %s17, 1
      %p166 = por %p164, %p165
      %p167 = scmp.ne.s32.totalorder %s156, %s157
      %p168 = scmp.eq.s32.totalorder %s17, 0
      %p169 = por %p167, %p168
      %p170 = scmp.ne.s32.totalorder %s156, %s157
      %p171 = scmp.eq.s32.totalorder %s18, 1
      %p172 = por %p170, %p171
      %p174 = scmp.ne.s32.totalorder %s157, %s173
      %p175 = scmp.eq.s32.totalorder %s18, 0
      %p176 = por %p174, %p175
      %p177 = scmp.le.s32.totalorder 1, %s12
      %p178 = scmp.lt.s32.totalorder %s12, 3
      %p179 = pnand %p177, %p178
      %p180 = pneg %p179
      // Predicated region
      $region9: #{conv_block_forward.2} parent=5 // pred_check
        _
      $region10: #{conv_block_forward.2} parent=5 // pred_check_branch
        %182 = sbr.rel (%p179) target = $region12
      $region11: #{conv_block_forward.2} parent=5 // pred_region
        %s183 = ssub.s32 %s12, 1
        // Predicated region
        $region13: #{conv_block_forward.2} parent=11 // pred_check
          %p184 = pneg %p73
        $region14: #{conv_block_forward.2} parent=11 // pred_check_branch
          %186 = sbr.rel (%p184) target = $region16
        $region15: #{conv_block_forward.2} parent=11 // pred_region
          _
        $region16: #{conv_block_forward.2} parent=11 // pred_fallthru
          _
        // Predicated region
        $region17: #{conv_block_forward.2} parent=11 // pred_check
          %p187 = pneg %p94
        $region18: #{conv_block_forward.2} parent=11 // pred_check_branch
          %189 = sbr.rel (%p187) target = $region20
        $region19: #{conv_block_forward.2} parent=11 // pred_region
          _
        $region20: #{conv_block_forward.2} parent=11 // pred_fallthru
          _
        // Predicated region
        $region21: #{conv_block_forward.2} parent=11 // pred_check
          %p190 = pneg %p115
        $region22: #{conv_block_forward.2} parent=11 // pred_check_branch
          %192 = sbr.rel (%p190) target = $region24
        $region23: #{conv_block_forward.2} parent=11 // pred_region
          _
        $region24: #{conv_block_forward.2} parent=11 // pred_fallthru
          _
      $region12: #{conv_block_forward.2} parent=5 // pred_fallthru
        _
      %p193 = scmp.lt.s32.totalorder %s12, 2
      // Predicated region
      $region25: #{conv_block_forward.2} parent=5 // pred_check
        %p194 = pneg %p193
      $region26: #{conv_block_forward.2} parent=5 // pred_check_branch
        %196 = sbr.rel (%p194) target = $region28
      $region27: #{conv_block_forward.2} parent=5 // pred_region
        // Predicated region
        $region29: #{conv_block_forward.2} parent=27 // pred_check
          %p197 = pneg %p46
        $region30: #{conv_block_forward.2} parent=27 // pred_check_branch
          %199 = sbr.rel (%p197) target = $region32
        $region31: #{conv_block_forward.2} parent=27 // pred_region
          %s200 = sand.u32 %s36, 1
          %s201 = sand.u32 %s36, 1
          %s202 = smul.addr %s201, 224
          %s203 = scalar_lea.vmem [#allocation2], %s202
          %s204 = sadd.s32 %s19, %s20
          %s205 = smul.u32 14, %s204
          %s206 = smul.addr %s205, 4
          %s207 = scalar_lea.vmem %s0, %s206
          // Predicated region
          $region33: #{conv_block_forward.2} parent=31 // pred_check
            _
          $region34: #{conv_block_forward.2} parent=31 // pred_check_branch
            %209 = sbr.rel (0) target = $region36
          $region35: #{conv_block_forward.2} parent=31 // pred_region
            // Predicated region
            $region37: #{conv_block_forward.2} parent=35 // pred_check
              _
            $region38: #{conv_block_forward.2} parent=35 // pred_check_branch
              %211 = sbr.rel target = $region40
            $region39: #{conv_block_forward.2} parent=35 // pred_region
              // Predicated region
              $region52: #{conv_block_forward.2} parent=39 // pred_check
                _
              $region53: #{conv_block_forward.2} parent=39 // pred_check_branch
                %336 = sbr.rel (0) target = $region55
              $region54: #{conv_block_forward.2} parent=39 // pred_region
                loop: start=0, step=1, limit=1
                $region56: #{conv_block_forward.2} parent=54 // loop_pre_header
                  _
                $region57: #{conv_block_forward.2} parent=54 // loop_header
                  %s338 = sphi 0, %s342
                  %p339 = scmp.ge.s32.totalorder %s338, 1
                  %s343 = sphi %s207, %s207
                  %s344 = sphi %s203, %s203
                $region58: #{conv_block_forward.2} parent=54 // loop_header_branch
                  %341 = sbr.rel (%p339) target = $region62
                $region59: #{conv_block_forward.2} parent=54 // loop_body
                  _
                $region60: #{conv_block_forward.2} parent=54 // loop_footer
                  %s342 = sadd.s32 1, %s338
                $region61: #{conv_block_forward.2} parent=54 // loop_footer_branch
                  %337 = sbr.rel target = $region57
                $region62: #{conv_block_forward.2} parent=54 // loop_exit
                  _
                loop: start=0, step=1, limit=1
                $region63: #{conv_block_forward.2} parent=54 // loop_pre_header
                  _
                $region64: #{conv_block_forward.2} parent=54 // loop_header
                  %s347 = sphi 0, %s351
                  %p348 = scmp.ge.s32.totalorder %s347, 1
                  %s352 = sphi %s207, %s207
                  %s353 = sphi %s203, %s203
                $region65: #{conv_block_forward.2} parent=54 // loop_header_branch
                  %350 = sbr.rel (%p348) target = $region69
                $region66: #{conv_block_forward.2} parent=54 // loop_body
                  %v354 = vld [vmem:[%s352] sm:$0xf]
                  %355 = vst [vmem:[%s353] sm:$0xf] %v354
                  %v356 = vld [vmem:[%s352 + $0x4] sm:$0xf]
                  %357 = vst [vmem:[%s353 + $0x4] sm:$0xf] %v356
                  %v358 = vld [vmem:[%s352 + $0x8] sm:$0xf]
                  %359 = vst [vmem:[%s353 + $0x8] sm:$0xf] %v358
                  %v360 = vld [vmem:[%s352 + $0xc] sm:$0xf]
                  %361 = vst [vmem:[%s353 + $0xc] sm:$0xf] %v360
                  %v362 = vld [vmem:[%s352 + $0x10] sm:$0xf]
                  %363 = vst [vmem:[%s353 + $0x10] sm:$0xf] %v362
                  %v364 = vld [vmem:[%s352 + $0x14] sm:$0xf]
                  %365 = vst [vmem:[%s353 + $0x14] sm:$0xf] %v364
                  %v366 = vld [vmem:[%s352 + $0x18] sm:$0xf]
                  %367 = vst [vmem:[%s353 + $0x18] sm:$0xf] %v366
                  %v368 = vld [vmem:[%s352 + $0x1c] sm:$0xf]
                  %369 = vst [vmem:[%s353 + $0x1c] sm:$0xf] %v368
                  %v370 = vld [vmem:[%s352 + $0x20] sm:$0xf]
                  %371 = vst [vmem:[%s353 + $0x20] sm:$0xf] %v370
                  %v372 = vld [vmem:[%s352 + $0x24] sm:$0xf]
                  %373 = vst [vmem:[%s353 + $0x24] sm:$0xf] %v372
                  %v374 = vld [vmem:[%s352 + $0x28] sm:$0xf]
                  %375 = vst [vmem:[%s353 + $0x28] sm:$0xf] %v374
                  %v376 = vld [vmem:[%s352 + $0x2c] sm:$0xf]
                  %377 = vst [vmem:[%s353 + $0x2c] sm:$0xf] %v376
                  %v378 = vld [vmem:[%s352 + $0x30] sm:$0xf]
                  %379 = vst [vmem:[%s353 + $0x30] sm:$0xf] %v378
                  %v380 = vld [vmem:[%s352 + $0x34] sm:$0xf]
                  %381 = vst [vmem:[%s353 + $0x34] sm:$0xf] %v380
                  %v382 = vld [vmem:[%s352 + $0x70] sm:$0xf]
                  %383 = vst [vmem:[%s353 + $0x38] sm:$0xf] %v382
                  %v384 = vld [vmem:[%s352 + $0x74] sm:$0xf]
                  %385 = vst [vmem:[%s353 + $0x3c] sm:$0xf] %v384
                  %v386 = vld [vmem:[%s352 + $0x78] sm:$0xf]
                  %387 = vst [vmem:[%s353 + $0x40] sm:$0xf] %v386
                  %v388 = vld [vmem:[%s352 + $0x7c] sm:$0xf]
                  %389 = vst [vmem:[%s353 + $0x44] sm:$0xf] %v388
                  %v390 = vld [vmem:[%s352 + $0x80] sm:$0xf]
                  %391 = vst [vmem:[%s353 + $0x48] sm:$0xf] %v390
                  %v392 = vld [vmem:[%s352 + $0x84] sm:$0xf]
                  %393 = vst [vmem:[%s353 + $0x4c] sm:$0xf] %v392
                  %v394 = vld [vmem:[%s352 + $0x88] sm:$0xf]
                  %395 = vst [vmem:[%s353 + $0x50] sm:$0xf] %v394
                  %v396 = vld [vmem:[%s352 + $0x8c] sm:$0xf]
                  %397 = vst [vmem:[%s353 + $0x54] sm:$0xf] %v396
                  %v398 = vld [vmem:[%s352 + $0x90] sm:$0xf]
                  %399 = vst [vmem:[%s353 + $0x58] sm:$0xf] %v398
                  %v400 = vld [vmem:[%s352 + $0x94] sm:$0xf]
                  %401 = vst [vmem:[%s353 + $0x5c] sm:$0xf] %v400
                  %v402 = vld [vmem:[%s352 + $0x98] sm:$0xf]
                  %403 = vst [vmem:[%s353 + $0x60] sm:$0xf] %v402
                  %v404 = vld [vmem:[%s352 + $0x9c] sm:$0xf]
                  %405 = vst [vmem:[%s353 + $0x64] sm:$0xf] %v404
                  %v406 = vld [vmem:[%s352 + $0xa0] sm:$0xf]
                  %407 = vst [vmem:[%s353 + $0x68] sm:$0xf] %v406
                  %v408 = vld [vmem:[%s352 + $0xa4] sm:$0xf]
                  %409 = vst [vmem:[%s353 + $0x6c] sm:$0xf] %v408
                  %v410 = vld [vmem:[%s352 + $0xe0] sm:$0xf]
                  %411 = vst [vmem:[%s353 + $0x70] sm:$0xf] %v410
                  %v412 = vld [vmem:[%s352 + $0xe4] sm:$0xf]
                  %413 = vst [vmem:[%s353 + $0x74] sm:$0xf] %v412
                  %v414 = vld [vmem:[%s352 + $0xe8] sm:$0xf]
                  %415 = vst [vmem:[%s353 + $0x78] sm:$0xf] %v414
                  %v416 = vld [vmem:[%s352 + $0xec] sm:$0xf]
                  %417 = vst [vmem:[%s353 + $0x7c] sm:$0xf] %v416
                  %v418 = vld [vmem:[%s352 + $0xf0] sm:$0xf]
                  %419 = vst [vmem:[%s353 + $0x80] sm:$0xf] %v418
                  %v420 = vld [vmem:[%s352 + $0xf4] sm:$0xf]
                  %421 = vst [vmem:[%s353 + $0x84] sm:$0xf] %v420
                  %v422 = vld [vmem:[%s352 + $0xf8] sm:$0xf]
                  %423 = vst [vmem:[%s353 + $0x88] sm:$0xf] %v422
                  %v424 = vld [vmem:[%s352 + $0xfc] sm:$0xf]
                  %425 = vst [vmem:[%s353 + $0x8c] sm:$0xf] %v424
                  %v426 = vld [vmem:[%s352 + $0x100] sm:$0xf]
                  %427 = vst [vmem:[%s353 + $0x90] sm:$0xf] %v426
                  %v428 = vld [vmem:[%s352 + $0x104] sm:$0xf]
                  %429 = vst [vmem:[%s353 + $0x94] sm:$0xf] %v428
                  %v430 = vld [vmem:[%s352 + $0x108] sm:$0xf]
                  %431 = vst [vmem:[%s353 + $0x98] sm:$0xf] %v430
                  %v432 = vld [vmem:[%s352 + $0x10c] sm:$0xf]
                  %433 = vst [vmem:[%s353 + $0x9c] sm:$0xf] %v432
                  %v434 = vld [vmem:[%s352 + $0x110] sm:$0xf]
                  %435 = vst [vmem:[%s353 + $0xa0] sm:$0xf] %v434
                  %v436 = vld [vmem:[%s352 + $0x114] sm:$0xf]
                  %437 = vst [vmem:[%s353 + $0xa4] sm:$0xf] %v436
                  %v438 = vld [vmem:[%s352 + $0x150] sm:$0xf]
                  %439 = vst [vmem:[%s353 + $0xa8] sm:$0xf] %v438
                  %v440 = vld [vmem:[%s352 + $0x154] sm:$0xf]
                  %441 = vst [vmem:[%s353 + $0xac] sm:$0xf] %v440
                  %v442 = vld [vmem:[%s352 + $0x158] sm:$0xf]
                  %443 = vst [vmem:[%s353 + $0xb0] sm:$0xf] %v442
                  %v444 = vld [vmem:[%s352 + $0x15c] sm:$0xf]
                  %445 = vst [vmem:[%s353 + $0xb4] sm:$0xf] %v444
                  %v446 = vld [vmem:[%s352 + $0x160] sm:$0xf]
                  %447 = vst [vmem:[%s353 + $0xb8] sm:$0xf] %v446
                  %v448 = vld [vmem:[%s352 + $0x164] sm:$0xf]
                  %449 = vst [vmem:[%s353 + $0xbc] sm:$0xf] %v448
                  %v450 = vld [vmem:[%s352 + $0x168] sm:$0xf]
                  %451 = vst [vmem:[%s353 + $0xc0] sm:$0xf] %v450
                  %v452 = vld [vmem:[%s352 + $0x16c] sm:$0xf]
                  %453 = vst [vmem:[%s353 + $0xc4] sm:$0xf] %v452
                  %v454 = vld [vmem:[%s352 + $0x170] sm:$0xf]
                  %455 = vst [vmem:[%s353 + $0xc8] sm:$0xf] %v454
                  %v456 = vld [vmem:[%s352 + $0x174] sm:$0xf]
                  %457 = vst [vmem:[%s353 + $0xcc] sm:$0xf] %v456
                  %v458 = vld [vmem:[%s352 + $0x178] sm:$0xf]
                  %459 = vst [vmem:[%s353 + $0xd0] sm:$0xf] %v458
                  %v460 = vld [vmem:[%s352 + $0x17c] sm:$0xf]
                  %461 = vst [vmem:[%s353 + $0xd4] sm:$0xf] %v460
                  %v462 = vld [vmem:[%s352 + $0x180] sm:$0xf]
                  %463 = vst [vmem:[%s353 + $0xd8] sm:$0xf] %v462
                  %v464 = vld [vmem:[%s352 + $0x184] sm:$0xf]
                  %465 = vst [vmem:[%s353 + $0xdc] sm:$0xf] %v464
                $region67: #{conv_block_forward.2} parent=54 // loop_footer
                  %s351 = sadd.s32 1, %s347
                $region68: #{conv_block_forward.2} parent=54 // loop_footer_branch
                  %346 = sbr.rel target = $region64
                $region69: #{conv_block_forward.2} parent=54 // loop_exit
                  _
              $region55: #{conv_block_forward.2} parent=39 // pred_fallthru
                _
            $region40: #{conv_block_forward.2} parent=35 // pred_fallthru
              _
            // Predicated region
            $region41: #{conv_block_forward.2} parent=35 // pred_check
              _
            $region42: #{conv_block_forward.2} parent=35 // pred_check_branch
              %213 = sbr.rel (0) target = $region44
            $region43: #{conv_block_forward.2} parent=35 // pred_region
              loop: start=0, step=1, limit=1
              $region45: #{conv_block_forward.2} parent=43 // loop_pre_header
                _
              $region46: #{conv_block_forward.2} parent=43 // loop_header
                %s216 = sphi 0, %s220
                %p217 = scmp.ge.s32.totalorder %s216, 1
                %s221 = sphi %s207, %s207
                %s222 = sphi %s203, %s203
              $region47: #{conv_block_forward.2} parent=43 // loop_header_branch
                %219 = sbr.rel (%p217) target = $region51
              $region48: #{conv_block_forward.2} parent=43 // loop_body
                %v223 = vld [vmem:[%s221] sm:$0xf]
                %224 = vst [vmem:[%s222] sm:$0xf] %v223
                %v225 = vld [vmem:[%s221 + $0x4] sm:$0xf]
                %226 = vst [vmem:[%s222 + $0x4] sm:$0xf] %v225
                %v227 = vld [vmem:[%s221 + $0x8] sm:$0xf]
                %228 = vst [vmem:[%s222 + $0x8] sm:$0xf] %v227
                %v229 = vld [vmem:[%s221 + $0xc] sm:$0xf]
                %230 = vst [vmem:[%s222 + $0xc] sm:$0xf] %v229
                %v231 = vld [vmem:[%s221 + $0x10] sm:$0xf]
                %232 = vst [vmem:[%s222 + $0x10] sm:$0xf] %v231
                %v233 = vld [vmem:[%s221 + $0x14] sm:$0xf]
                %234 = vst [vmem:[%s222 + $0x14] sm:$0xf] %v233
                %v235 = vld [vmem:[%s221 + $0x18] sm:$0xf]
                %236 = vst [vmem:[%s222 + $0x18] sm:$0xf] %v235
                %v237 = vld [vmem:[%s221 + $0x1c] sm:$0xf]
                %238 = vst [vmem:[%s222 + $0x1c] sm:$0xf] %v237
                %v239 = vld [vmem:[%s221 + $0x20] sm:$0xf]
                %240 = vst [vmem:[%s222 + $0x20] sm:$0xf] %v239
                %v241 = vld [vmem:[%s221 + $0x24] sm:$0xf]
                %242 = vst [vmem:[%s222 + $0x24] sm:$0xf] %v241
                %v243 = vld [vmem:[%s221 + $0x28] sm:$0xf]
                %244 = vst [vmem:[%s222 + $0x28] sm:$0xf] %v243
                %v245 = vld [vmem:[%s221 + $0x2c] sm:$0xf]
                %246 = vst [vmem:[%s222 + $0x2c] sm:$0xf] %v245
                %v247 = vld [vmem:[%s221 + $0x30] sm:$0xf]
                %248 = vst [vmem:[%s222 + $0x30] sm:$0xf] %v247
                %v249 = vld [vmem:[%s221 + $0x34] sm:$0xf]
                %250 = vst [vmem:[%s222 + $0x34] sm:$0xf] %v249
                %v251 = vld [vmem:[%s221 + $0x70] sm:$0xf]
                %252 = vst [vmem:[%s222 + $0x38] sm:$0xf] %v251
                %v253 = vld [vmem:[%s221 + $0x74] sm:$0xf]
                %254 = vst [vmem:[%s222 + $0x3c] sm:$0xf] %v253
                %v255 = vld [vmem:[%s221 + $0x78] sm:$0xf]
                %256 = vst [vmem:[%s222 + $0x40] sm:$0xf] %v255
                %v257 = vld [vmem:[%s221 + $0x7c] sm:$0xf]
                %258 = vst [vmem:[%s222 + $0x44] sm:$0xf] %v257
                %v259 = vld [vmem:[%s221 + $0x80] sm:$0xf]
                %260 = vst [vmem:[%s222 + $0x48] sm:$0xf] %v259
                %v261 = vld [vmem:[%s221 + $0x84] sm:$0xf]
                %262 = vst [vmem:[%s222 + $0x4c] sm:$0xf] %v261
                %v263 = vld [vmem:[%s221 + $0x88] sm:$0xf]
                %264 = vst [vmem:[%s222 + $0x50] sm:$0xf] %v263
                %v265 = vld [vmem:[%s221 + $0x8c] sm:$0xf]
                %266 = vst [vmem:[%s222 + $0x54] sm:$0xf] %v265
                %v267 = vld [vmem:[%s221 + $0x90] sm:$0xf]
                %268 = vst [vmem:[%s222 + $0x58] sm:$0xf] %v267
                %v269 = vld [vmem:[%s221 + $0x94] sm:$0xf]
                %270 = vst [vmem:[%s222 + $0x5c] sm:$0xf] %v269
                %v271 = vld [vmem:[%s221 + $0x98] sm:$0xf]
                %272 = vst [vmem:[%s222 + $0x60] sm:$0xf] %v271
                %v273 = vld [vmem:[%s221 + $0x9c] sm:$0xf]
                %274 = vst [vmem:[%s222 + $0x64] sm:$0xf] %v273
                %v275 = vld [vmem:[%s221 + $0xa0] sm:$0xf]
                %276 = vst [vmem:[%s222 + $0x68] sm:$0xf] %v275
                %v277 = vld [vmem:[%s221 + $0xa4] sm:$0xf]
                %278 = vst [vmem:[%s222 + $0x6c] sm:$0xf] %v277
                %v279 = vld [vmem:[%s221 + $0xe0] sm:$0xf]
                %280 = vst [vmem:[%s222 + $0x70] sm:$0xf] %v279
                %v281 = vld [vmem:[%s221 + $0xe4] sm:$0xf]
                %282 = vst [vmem:[%s222 + $0x74] sm:$0xf] %v281
                %v283 = vld [vmem:[%s221 + $0xe8] sm:$0xf]
                %284 = vst [vmem:[%s222 + $0x78] sm:$0xf] %v283
                %v285 = vld [vmem:[%s221 + $0xec] sm:$0xf]
                %286 = vst [vmem:[%s222 + $0x7c] sm:$0xf] %v285
                %v287 = vld [vmem:[%s221 + $0xf0] sm:$0xf]
                %288 = vst [vmem:[%s222 + $0x80] sm:$0xf] %v287
                %v289 = vld [vmem:[%s221 + $0xf4] sm:$0xf]
                %290 = vst [vmem:[%s222 + $0x84] sm:$0xf] %v289
                %v291 = vld [vmem:[%s221 + $0xf8] sm:$0xf]
                %292 = vst [vmem:[%s222 + $0x88] sm:$0xf] %v291
                %v293 = vld [vmem:[%s221 + $0xfc] sm:$0xf]
                %294 = vst [vmem:[%s222 + $0x8c] sm:$0xf] %v293
                %v295 = vld [vmem:[%s221 + $0x100] sm:$0xf]
                %296 = vst [vmem:[%s222 + $0x90] sm:$0xf] %v295
                %v297 = vld [vmem:[%s221 + $0x104] sm:$0xf]
                %298 = vst [vmem:[%s222 + $0x94] sm:$0xf] %v297
                %v299 = vld [vmem:[%s221 + $0x108] sm:$0xf]
                %300 = vst [vmem:[%s222 + $0x98] sm:$0xf] %v299
                %v301 = vld [vmem:[%s221 + $0x10c] sm:$0xf]
                %302 = vst [vmem:[%s222 + $0x9c] sm:$0xf] %v301
                %v303 = vld [vmem:[%s221 + $0x110] sm:$0xf]
                %304 = vst [vmem:[%s222 + $0xa0] sm:$0xf] %v303
                %v305 = vld [vmem:[%s221 + $0x114] sm:$0xf]
                %306 = vst [vmem:[%s222 + $0xa4] sm:$0xf] %v305
                %v307 = vld [vmem:[%s221 + $0x150] sm:$0xf]
                %308 = vst [vmem:[%s222 + $0xa8] sm:$0xf] %v307
                %v309 = vld [vmem:[%s221 + $0x154] sm:$0xf]
                %310 = vst [vmem:[%s222 + $0xac] sm:$0xf] %v309
                %v311 = vld [vmem:[%s221 + $0x158] sm:$0xf]
                %312 = vst [vmem:[%s222 + $0xb0] sm:$0xf] %v311
                %v313 = vld [vmem:[%s221 + $0x15c] sm:$0xf]
                %314 = vst [vmem:[%s222 + $0xb4] sm:$0xf] %v313
                %v315 = vld [vmem:[%s221 + $0x160] sm:$0xf]
                %316 = vst [vmem:[%s222 + $0xb8] sm:$0xf] %v315
                %v317 = vld [vmem:[%s221 + $0x164] sm:$0xf]
                %318 = vst [vmem:[%s222 + $0xbc] sm:$0xf] %v317
                %v319 = vld [vmem:[%s221 + $0x168] sm:$0xf]
                %320 = vst [vmem:[%s222 + $0xc0] sm:$0xf] %v319
                %v321 = vld [vmem:[%s221 + $0x16c] sm:$0xf]
                %322 = vst [vmem:[%s222 + $0xc4] sm:$0xf] %v321
                %v323 = vld [vmem:[%s221 + $0x170] sm:$0xf]
                %324 = vst [vmem:[%s222 + $0xc8] sm:$0xf] %v323
                %v325 = vld [vmem:[%s221 + $0x174] sm:$0xf]
                %326 = vst [vmem:[%s222 + $0xcc] sm:$0xf] %v325
                %v327 = vld [vmem:[%s221 + $0x178] sm:$0xf]
                %328 = vst [vmem:[%s222 + $0xd0] sm:$0xf] %v327
                %v329 = vld [vmem:[%s221 + $0x17c] sm:$0xf]
                %330 = vst [vmem:[%s222 + $0xd4] sm:$0xf] %v329
                %v331 = vld [vmem:[%s221 + $0x180] sm:$0xf]
                %332 = vst [vmem:[%s222 + $0xd8] sm:$0xf] %v331
                %v333 = vld [vmem:[%s221 + $0x184] sm:$0xf]
                %334 = vst [vmem:[%s222 + $0xdc] sm:$0xf] %v333
              $region49: #{conv_block_forward.2} parent=43 // loop_footer
                %s220 = sadd.s32 1, %s216
              $region50: #{conv_block_forward.2} parent=43 // loop_footer_branch
                %215 = sbr.rel target = $region46
              $region51: #{conv_block_forward.2} parent=43 // loop_exit
                _
            $region44: #{conv_block_forward.2} parent=35 // pred_fallthru
              _
          $region36: #{conv_block_forward.2} parent=31 // pred_fallthru
            _
          %466 = vnop
        $region32: #{conv_block_forward.2} parent=27 // pred_fallthru
          _
      $region28: #{conv_block_forward.2} parent=5 // pred_fallthru
        _
      %p467 = scmp.le.s32.totalorder 1, %s12
      %p468 = scmp.lt.s32.totalorder %s12, 3
      %p469 = pnand %p467, %p468
      %p470 = pneg %p469
      // Predicated region
      $region70: #{conv_block_forward.2} parent=5 // pred_check
        _
      $region71: #{conv_block_forward.2} parent=5 // pred_check_branch
        %472 = sbr.rel (%p469) target = $region73
      $region72: #{conv_block_forward.2} parent=5 // pred_region
        %s473 = ssub.s32 %s12, 1
        %s474 = sand.u32 %s39, 1
        %s475 = sand.u32 %s39, 1
        %s476 = smul.addr %s475, 224
        %s477 = scalar_lea.vmem [#allocation2], %s476
        // Predicated region
        $region74: #{conv_block_forward.2} parent=72 // pred_check
          %p478 = pneg %p52
        $region75: #{conv_block_forward.2} parent=72 // pred_check_branch
          %480 = sbr.rel (%p478) target = $region77
        $region76: #{conv_block_forward.2} parent=72 // pred_region
          _
        $region77: #{conv_block_forward.2} parent=72 // pred_fallthru
          _
        %s481 = sand.u32 %s39, 1
        %s482 = sand.u32 %s39, 1
        %s483 = smul.addr %s482, 224
        %s484 = scalar_lea.vmem [#allocation2], %s483
        %p485 = pneg %p52
        %p486 = pneg %p49
        %p487 = pneg %p73
        %p488 = pneg %p70
        %p489 = pneg %p94
        %p490 = pneg %p91
        %p491 = pneg %p115
        %p492 = pneg %p112
        %p493 = pneg %p143
        %p494 = pneg %p140
        %s495 = sadd.s32 %s21, %s22
        %s496 = smul.u32 14, %s495
        %p497 = scmp.lt.s32.totalorder %s496, 27
        %s498 = scalar_select %p497, %s496, 27
        %s499 = smul.addr %s498, 4
        %s500 = scalar_lea.vmem %s4, %s499
        %p501 = pneg %p169
        %p502 = pneg %p166
        %p503 = scmp.lt.s32.totalorder %s21, 1
        %s504 = scalar_select %p503, %s21, 1
        %s505 = smul.addr %s504, 2
        %s506 = scalar_lea.vmem %s5, %s505
        %s507 = sadd.s32 %s21, %s22
        %s508 = smul.u32 14, %s507
        %s509 = sadd.s32 %s21, %s22
        %s510 = smul.u32 14, %s509
        %p511 = scmp.lt.s32.totalorder %s510, 27
        %s512 = scalar_select %p511, %s510, 27
        %s513 = smul.addr %s512, 4
        %s514 = scalar_lea.vmem %s4, %s513
        %s515 = sadd.s32 %s21, %s22
        %s516 = smul.u32 14, %s515
        %p517 = scmp.lt.s32.totalorder %s21, 1
        %s518 = scalar_select %p517, %s21, 1
        %s519 = smul.addr %s518, 2
        %s520 = scalar_lea.vmem %s5, %s519
        %p522 = scmp.eq.s32.totalorder %s22, 0
        // Predicated region
        $region78: #{conv_block_forward.2} parent=72 // pred_check
          %p523 = pneg %p522
        $region79: #{conv_block_forward.2} parent=72 // pred_check_branch
          %525 = sbr.rel (%p523) target = $region81
        $region80: #{conv_block_forward.2} parent=72 // pred_region
          %526 = vst [vmem:[%s520] sm:$0x3] 0.0
        $region81: #{conv_block_forward.2} parent=72 // pred_fallthru
          _
        %v527 = vld [vmem:[%s1] sm:$0xf]
        %v528 = vld [vmem:[%s1 + $0x4] sm:$0xf]
        %v529 = vld [vmem:[%s1 + $0x8] sm:$0xf]
        %v530 = vld [vmem:[%s1 + $0xc] sm:$0xf]
        %v531 = vld [vmem:[%s1 + $0x10] sm:$0x3]
        %v532 = vld [vmem:[%s2] sm:$0x1]
        %v533 = vld [vmem:[%s477] sm:$0xf]
        %v534 = vld [vmem:[%s477 + $0x4] sm:$0xf]
        %v535 = vld [vmem:[%s477 + $0x8] sm:$0xf]
        %v536 = vld [vmem:[%s477 + $0xc] sm:$0xf]
        %v537 = vld [vmem:[%s477 + $0x10] sm:$0xf]
        %v538 = vld [vmem:[%s477 + $0x14] sm:$0xf]
        %v539 = vld [vmem:[%s477 + $0x18] sm:$0xf]
        %v540 = vld [vmem:[%s477 + $0x1c] sm:$0xf]
        %v541 = vld [vmem:[%s477 + $0x20] sm:$0xf]
        %v542 = vld [vmem:[%s477 + $0x24] sm:$0xf]
        %v543 = vld [vmem:[%s477 + $0x28] sm:$0xf]
        %v544 = vld [vmem:[%s477 + $0x2c] sm:$0xf]
        %v545 = vld [vmem:[%s477 + $0x30] sm:$0xf]
        %v546 = vld [vmem:[%s477 + $0x34] sm:$0xf]
        %v548 = vlaneseq
        %v549 = vshrl.u32 %v548, 7
        %v550 = vsub.s32 0, %v549
        %v551 = vrot.slane %v532, %v550
        %v567 = vunpack.c.l.b16 %v533
        %v568 = vunpack.c.l.b16 %v534
        %v569 = vunpack.c.l.b16 %v535
        %v570 = vunpack.c.l.b16 %v536
        %v571 = vunpack.c.l.b16 %v537
        %v572 = vunpack.c.l.b16 %v538
        %v573 = vunpack.c.l.b16 %v539
        %v574 = vunpack.c.l.b16 %v540
        %v575 = vunpack.c.l.b16 %v541
        %v576 = vunpack.c.l.b16 %v542
        %v577 = vunpack.c.l.b16 %v543
        %v578 = vunpack.c.l.b16 %v544
        %v579 = vunpack.c.l.b16 %v545
        %v580 = vunpack.c.l.b16 %v546
        %v581 = vpack.c.b16 %v568, %v567
        %v582 = vpack.c.b16 %v570, %v569
        %v583 = vpack.c.b16 %v572, %v571
        %v584 = vpack.c.b16 %v574, %v573
        %v585 = vpack.c.b16 %v576, %v575
        %v586 = vpack.c.b16 %v578, %v577
        %v587 = vpack.c.b16 %v580, %v579
        %v593 = vunpack.c.l.b16 %v527
        %v594 = vunpack.c.l.b16 %v528
        %v595 = vunpack.c.l.b16 %v529
        %v596 = vunpack.c.l.b16 %v530
        %v597 = vunpack.c.l.b16 %v531
        %v598 = vpack.c.b16 %v594, %v593
        %v599 = vpack.c.b16 %v596, %v595
        %v600 = vpack.c.b16 %v597, %v597
        %vm603 = vcmask 293888
        %v605 = vsel %vm603, %v581, 0
        %v608 = vsel %vm603, %v582, 0
        %v611 = vsel %vm603, %v583, 0
        %v614 = vsel %vm603, %v584, 0
        %v617 = vsel %vm603, %v585, 0
        %v620 = vsel %vm603, %v586, 0
        %v623 = vsel %vm603, %v587, 0
        %vm625 = vcmask 1041408
        %v627 = vsel %vm625, %v600, 0
        %629 = vmatprep.subr.bf16.mxu0 0
        %630 = vmatpush1.bf16.msra.mxu0 %v598
        %631 = vmatprep.subr.bf16.mxu0 0
        %632 = vmatpush1.bf16.msra.mxu0 %v599
        %633 = vmatprep.subr.bf16.mxu0 0
        %634 = vmatpush1.bf16.msra.mxu0 %v627
        %635 = vmatprep.subr.bf16.mxu0 0
        %636 = vmatpush1.bf16.msra.mxu0 0
        %637 = vmatprep.subr.bf16.mxu0 0
        %638 = vmatpush1.bf16.msra.mxu0 0
        %639 = vmatprep.subr.bf16.mxu0 0
        %640 = vmatpush1.bf16.msra.mxu0 0
        %641 = vmatprep.subr.bf16.mxu0 0
        %642 = vmatpush1.bf16.msra.mxu0 0
        %643 = vmatprep.subr.bf16.mxu0 0
        %644 = vmatpush1.bf16.msra.mxu0 0
        %645 = vmatprep.subr.bf16.mxu0 0
        %646 = vmatpush1.bf16.msra.mxu0 0
        %647 = vmatprep.subr.bf16.mxu0 0
        %648 = vmatpush1.bf16.msra.mxu0 0
        %649 = vmatprep.subr.bf16.mxu0 0
        %650 = vmatpush1.bf16.msra.mxu0 0
        %651 = vmatprep.subr.bf16.mxu0 0
        %652 = vmatpush1.bf16.msra.mxu0 0
        %653 = vmatprep.subr.bf16.mxu0 0
        %654 = vmatpush1.bf16.msra.mxu0 0
        %655 = vmatprep.subr.bf16.mxu0 0
        %656 = vmatpush1.bf16.msra.mxu0 0
        %657 = vmatprep.subr.bf16.mxu0 0
        %658 = vmatpush1.bf16.msra.mxu0 0
        %659 = vmatprep.subr.bf16.mxu0 0
        %660 = vmatpush1.bf16.msra.mxu0 0
        %661 = vmatprep.mubr.bf16.mxu0 0
        %662 = vmatmul.mubr.bf16.gmra.mrb[0].mxu0 %v605
        %v663 = vpop.f32.mrb[0].mxu0
        %v664 = vadd.f32 %v551, %v663
        %v665 = vpop.f32.mrb[0].mxu0
        %v666 = vpop.f32.mrb[0].mxu0
        %v667 = vadd.f32 %v551, %v666
        %v668 = vpop.f32.mrb[0].mxu0
        %669 = vmatprep.mubr.bf16.mxu0 0
        %670 = vmatmul.mubr.bf16.gmra.mrb[0].mxu0 %v608
        %v671 = vpop.f32.mrb[0].mxu0
        %v672 = vadd.f32 %v551, %v671
        %v673 = vpop.f32.mrb[0].mxu0
        %v674 = vpop.f32.mrb[0].mxu0
        %v675 = vadd.f32 %v551, %v674
        %v676 = vpop.f32.mrb[0].mxu0
        %677 = vmatprep.mubr.bf16.mxu0 0
        %678 = vmatmul.mubr.bf16.gmra.mrb[0].mxu0 %v611
        %v679 = vpop.f32.mrb[0].mxu0
        %v680 = vadd.f32 %v551, %v679
        %v681 = vpop.f32.mrb[0].mxu0
        %v682 = vpop.f32.mrb[0].mxu0
        %v683 = vadd.f32 %v551, %v682
        %v684 = vpop.f32.mrb[0].mxu0
        %685 = vmatprep.mubr.bf16.mxu0 0
        %686 = vmatmul.mubr.bf16.gmra.mrb[0].mxu0 %v614
        %v687 = vpop.f32.mrb[0].mxu0
        %v688 = vadd.f32 %v551, %v687
        %v689 = vpop.f32.mrb[0].mxu0
        %v690 = vpop.f32.mrb[0].mxu0
        %v691 = vadd.f32 %v551, %v690
        %v692 = vpop.f32.mrb[0].mxu0
        %693 = vmatprep.mubr.bf16.mxu0 0
        %694 = vmatmul.mubr.bf16.gmra.mrb[0].mxu0 %v617
        %v695 = vpop.f32.mrb[0].mxu0
        %v696 = vadd.f32 %v551, %v695
        %v697 = vpop.f32.mrb[0].mxu0
        %v698 = vpop.f32.mrb[0].mxu0
        %v699 = vadd.f32 %v551, %v698
        %v700 = vpop.f32.mrb[0].mxu0
        %701 = vmatprep.mubr.bf16.mxu0 0
        %702 = vmatmul.mubr.bf16.gmra.mrb[0].mxu0 %v620
        %v703 = vpop.f32.mrb[0].mxu0
        %v704 = vadd.f32 %v551, %v703
        %v705 = vpop.f32.mrb[0].mxu0
        %v706 = vpop.f32.mrb[0].mxu0
        %v707 = vadd.f32 %v551, %v706
        %v708 = vpop.f32.mrb[0].mxu0
        %709 = vmatprep.mubr.bf16.mxu0 0
        %710 = vmatmul.mubr.bf16.gmra.mrb[0].mxu0 %v623
        %v711 = vpop.f32.mrb[0].mxu0
        %v712 = vadd.f32 %v551, %v711
        %v713 = vpop.f32.mrb[0].mxu0
        %v714 = vpop.f32.mrb[0].mxu0
        %v715 = vadd.f32 %v551, %v714
        %v716 = vpop.f32.mrb[0].mxu0
        %717 = vdwg.mxu0
        %v718 = vmax.f32 %v664, 0.0
        %v719 = vmax.f32 %v667, 0.0
        %v720 = vmax.f32 %v672, 0.0
        %v721 = vmax.f32 %v675, 0.0
        %v722 = vmax.f32 %v680, 0.0
        %v723 = vmax.f32 %v683, 0.0
        %v724 = vmax.f32 %v688, 0.0
        %v725 = vmax.f32 %v691, 0.0
        %v726 = vmax.f32 %v696, 0.0
        %v727 = vmax.f32 %v699, 0.0
        %v728 = vmax.f32 %v704, 0.0
        %v729 = vmax.f32 %v707, 0.0
        %v730 = vmax.f32 %v712, 0.0
        %v731 = vmax.f32 %v715, 0.0
        %s732 = scalar_lea.vmem %s477, 56 [#allocation2]
        %v733 = vld [vmem:[%s732] sm:$0xf]
        %v734 = vld [vmem:[%s732 + $0x4] sm:$0xf]
        %v735 = vld [vmem:[%s732 + $0x8] sm:$0xf]
        %v736 = vld [vmem:[%s732 + $0xc] sm:$0xf]
        %v737 = vld [vmem:[%s732 + $0x10] sm:$0xf]
        %v738 = vld [vmem:[%s732 + $0x14] sm:$0xf]
        %v739 = vld [vmem:[%s732 + $0x18] sm:$0xf]
        %v740 = vld [vmem:[%s732 + $0x1c] sm:$0xf]
        %v741 = vld [vmem:[%s732 + $0x20] sm:$0xf]
        %v742 = vld [vmem:[%s732 + $0x24] sm:$0xf]
        %v743 = vld [vmem:[%s732 + $0x28] sm:$0xf]
        %v744 = vld [vmem:[%s732 + $0x2c] sm:$0xf]
        %v745 = vld [vmem:[%s732 + $0x30] sm:$0xf]
        %v746 = vld [vmem:[%s732 + $0x34] sm:$0xf]
        %v761 = vunpack.c.l.b16 %v733
        %v762 = vunpack.c.l.b16 %v734
        %v763 = vunpack.c.l.b16 %v735
        %v764 = vunpack.c.l.b16 %v736
        %v765 = vunpack.c.l.b16 %v737
        %v766 = vunpack.c.l.b16 %v738
        %v767 = vunpack.c.l.b16 %v739
        %v768 = vunpack.c.l.b16 %v740
        %v769 = vunpack.c.l.b16 %v741
        %v770 = vunpack.c.l.b16 %v742
        %v771 = vunpack.c.l.b16 %v743
        %v772 = vunpack.c.l.b16 %v744
        %v773 = vunpack.c.l.b16 %v745
        %v774 = vunpack.c.l.b16 %v746
        %v775 = vpack.c.b16 %v762, %v761
        %v776 = vpack.c.b16 %v764, %v763
        %v777 = vpack.c.b16 %v766, %v765
        %v778 = vpack.c.b16 %v768, %v767
        %v779 = vpack.c.b16 %v770, %v769
        %v780 = vpack.c.b16 %v772, %v771
        %v781 = vpack.c.b16 %v774, %v773
        %v783 = vsel %vm603, %v775, 0
        %v786 = vsel %vm603, %v776, 0
        %v789 = vsel %vm603, %v777, 0
        %v792 = vsel %vm603, %v778, 0
        %v795 = vsel %vm603, %v779, 0
        %v798 = vsel %vm603, %v780, 0
        %v801 = vsel %vm603, %v781, 0
        %803 = vmatprep.subr.bf16.mxu0 0
        %804 = vmatpush1.bf16.msra.mxu0 %v598
        %805 = vmatprep.subr.bf16.mxu0 0
        %806 = vmatpush1.bf16.msra.mxu0 %v599
        %807 = vmatprep.subr.bf16.mxu0 0
        %808 = vmatpush1.bf16.msra.mxu0 %v627
        %809 = vmatprep.subr.bf16.mxu0 0
        %810 = vmatpush1.bf16.msra.mxu0 0
        %811 = vmatprep.subr.bf16.mxu0 0
        %812 = vmatpush1.bf16.msra.mxu0 0
        %813 = vmatprep.subr.bf16.mxu0 0
        %814 = vmatpush1.bf16.msra.mxu0 0
        %815 = vmatprep.subr.bf16.mxu0 0
        %816 = vmatpush1.bf16.msra.mxu0 0
        %817 = vmatprep.subr.bf16.mxu0 0
        %818 = vmatpush1.bf16.msra.mxu0 0
        %819 = vmatprep.subr.bf16.mxu0 0
        %820 = vmatpush1.bf16.msra.mxu0 0
        %821 = vmatprep.subr.bf16.mxu0 0
        %822 = vmatpush1.bf16.msra.mxu0 0
        %823 = vmatprep.subr.bf16.mxu0 0
        %824 = vmatpush1.bf16.msra.mxu0 0
        %825 = vmatprep.subr.bf16.mxu0 0
        %826 = vmatpush1.bf16.msra.mxu0 0
        %827 = vmatprep.subr.bf16.mxu0 0
        %828 = vmatpush1.bf16.msra.mxu0 0
        %829 = vmatprep.subr.bf16.mxu0 0
        %830 = vmatpush1.bf16.msra.mxu0 0
        %831 = vmatprep.subr.bf16.mxu0 0
        %832 = vmatpush1.bf16.msra.mxu0 0
        %833 = vmatprep.subr.bf16.mxu0 0
        %834 = vmatpush1.bf16.msra.mxu0 0
        %835 = vmatprep.mubr.bf16.mxu0 0
        %836 = vmatmul.mubr.bf16.gmra.mrb[0].mxu0 %v783
        %v837 = vpop.f32.mrb[0].mxu0
        %v838 = vadd.f32 %v551, %v837
        %v839 = vpop.f32.mrb[0].mxu0
        %v840 = vpop.f32.mrb[0].mxu0
        %v841 = vadd.f32 %v551, %v840
        %v842 = vpop.f32.mrb[0].mxu0
        %843 = vmatprep.mubr.bf16.mxu0 0
        %844 = vmatmul.mubr.bf16.gmra.mrb[0].mxu0 %v786
        %v845 = vpop.f32.mrb[0].mxu0
        %v846 = vadd.f32 %v551, %v845
        %v847 = vpop.f32.mrb[0].mxu0
        %v848 = vpop.f32.mrb[0].mxu0
        %v849 = vadd.f32 %v551, %v848
        %v850 = vpop.f32.mrb[0].mxu0
        %851 = vmatprep.mubr.bf16.mxu0 0
        %852 = vmatmul.mubr.bf16.gmra.mrb[0].mxu0 %v789
        %v853 = vpop.f32.mrb[0].mxu0
        %v854 = vadd.f32 %v551, %v853
        %v855 = vpop.f32.mrb[0].mxu0
        %v856 = vpop.f32.mrb[0].mxu0
        %v857 = vadd.f32 %v551, %v856
        %v858 = vpop.f32.mrb[0].mxu0
        %859 = vmatprep.mubr.bf16.mxu0 0
        %860 = vmatmul.mubr.bf16.gmra.mrb[0].mxu0 %v792
        %v861 = vpop.f32.mrb[0].mxu0
        %v862 = vadd.f32 %v551, %v861
        %v863 = vpop.f32.mrb[0].mxu0
        %v864 = vpop.f32.mrb[0].mxu0
        %v865 = vadd.f32 %v551, %v864
        %v866 = vpop.f32.mrb[0].mxu0
        %867 = vmatprep.mubr.bf16.mxu0 0
        %868 = vmatmul.mubr.bf16.gmra.mrb[0].mxu0 %v795
        %v869 = vpop.f32.mrb[0].mxu0
        %v870 = vadd.f32 %v551, %v869
        %v871 = vpop.f32.mrb[0].mxu0
        %v872 = vpop.f32.mrb[0].mxu0
        %v873 = vadd.f32 %v551, %v872
        %v874 = vpop.f32.mrb[0].mxu0
        %875 = vmatprep.mubr.bf16.mxu0 0
        %876 = vmatmul.mubr.bf16.gmra.mrb[0].mxu0 %v798
        %v877 = vpop.f32.mrb[0].mxu0
        %v878 = vadd.f32 %v551, %v877
        %v879 = vpop.f32.mrb[0].mxu0
        %v880 = vpop.f32.mrb[0].mxu0
        %v881 = vadd.f32 %v551, %v880
        %v882 = vpop.f32.mrb[0].mxu0
        %883 = vmatprep.mubr.bf16.mxu0 0
        %884 = vmatmul.mubr.bf16.gmra.mrb[0].mxu0 %v801
        %v885 = vpop.f32.mrb[0].mxu0
        %v886 = vadd.f32 %v551, %v885
        %v887 = vpop.f32.mrb[0].mxu0
        %v888 = vpop.f32.mrb[0].mxu0
        %v889 = vadd.f32 %v551, %v888
        %v890 = vpop.f32.mrb[0].mxu0
        %891 = vdwg.mxu0
        %v892 = vmax.f32 %v838, 0.0
        %v893 = vmax.f32 %v841, 0.0
        %v894 = vmax.f32 %v846, 0.0
        %v895 = vmax.f32 %v849, 0.0
        %v896 = vmax.f32 %v854, 0.0
        %v897 = vmax.f32 %v857, 0.0
        %v898 = vmax.f32 %v862, 0.0
        %v899 = vmax.f32 %v865, 0.0
        %v900 = vmax.f32 %v870, 0.0
        %v901 = vmax.f32 %v873, 0.0
        %v902 = vmax.f32 %v878, 0.0
        %v903 = vmax.f32 %v881, 0.0
        %v904 = vmax.f32 %v886, 0.0
        %v905 = vmax.f32 %v889, 0.0
        %s906 = scalar_lea.vmem %s477, 112 [#allocation2]
        %v907 = vld [vmem:[%s906] sm:$0xf]
        %v908 = vld [vmem:[%s906 + $0x4] sm:$0xf]
        %v909 = vld [vmem:[%s906 + $0x8] sm:$0xf]
        %v910 = vld [vmem:[%s906 + $0xc] sm:$0xf]
        %v911 = vld [vmem:[%s906 + $0x10] sm:$0xf]
        %v912 = vld [vmem:[%s906 + $0x14] sm:$0xf]
        %v913 = vld [vmem:[%s906 + $0x18] sm:$0xf]
        %v914 = vld [vmem:[%s906 + $0x1c] sm:$0xf]
        %v915 = vld [vmem:[%s906 + $0x20] sm:$0xf]
        %v916 = vld [vmem:[%s906 + $0x24] sm:$0xf]
        %v917 = vld [vmem:[%s906 + $0x28] sm:$0xf]
        %v918 = vld [vmem:[%s906 + $0x2c] sm:$0xf]
        %v919 = vld [vmem:[%s906 + $0x30] sm:$0xf]
        %v920 = vld [vmem:[%s906 + $0x34] sm:$0xf]
        %v935 = vunpack.c.l.b16 %v907
        %v936 = vunpack.c.l.b16 %v908
        %v937 = vunpack.c.l.b16 %v909
        %v938 = vunpack.c.l.b16 %v910
        %v939 = vunpack.c.l.b16 %v911
        %v940 = vunpack.c.l.b16 %v912
        %v941 = vunpack.c.l.b16 %v913
        %v942 = vunpack.c.l.b16 %v914
        %v943 = vunpack.c.l.b16 %v915
        %v944 = vunpack.c.l.b16 %v916
        %v945 = vunpack.c.l.b16 %v917
        %v946 = vunpack.c.l.b16 %v918
        %v947 = vunpack.c.l.b16 %v919
        %v948 = vunpack.c.l.b16 %v920
        %v949 = vpack.c.b16 %v936, %v935
        %v950 = vpack.c.b16 %v938, %v937
        %v951 = vpack.c.b16 %v940, %v939
        %v952 = vpack.c.b16 %v942, %v941
        %v953 = vpack.c.b16 %v944, %v943
        %v954 = vpack.c.b16 %v946, %v945
        %v955 = vpack.c.b16 %v948, %v947
        %v957 = vsel %vm603, %v949, 0
        %v960 = vsel %vm603, %v950, 0
        %v963 = vsel %vm603, %v951, 0
        %v966 = vsel %vm603, %v952, 0
        %v969 = vsel %vm603, %v953, 0
        %v972 = vsel %vm603, %v954, 0
        %v975 = vsel %vm603, %v955, 0
        %977 = vmatprep.subr.bf16.mxu0 0
        %978 = vmatpush1.bf16.msra.mxu0 %v598
        %979 = vmatprep.subr.bf16.mxu0 0
        %980 = vmatpush1.bf16.msra.mxu0 %v599
        %981 = vmatprep.subr.bf16.mxu0 0
        %982 = vmatpush1.bf16.msra.mxu0 %v627
        %983 = vmatprep.subr.bf16.mxu0 0
        %984 = vmatpush1.bf16.msra.mxu0 0
        %985 = vmatprep.subr.bf16.mxu0 0
        %986 = vmatpush1.bf16.msra.mxu0 0
        %987 = vmatprep.subr.bf16.mxu0 0
        %988 = vmatpush1.bf16.msra.mxu0 0
        %989 = vmatprep.subr.bf16.mxu0 0
        %990 = vmatpush1.bf16.msra.mxu0 0
        %991 = vmatprep.subr.bf16.mxu0 0
        %992 = vmatpush1.bf16.msra.mxu0 0
        %993 = vmatprep.subr.bf16.mxu0 0
        %994 = vmatpush1.bf16.msra.mxu0 0
        %995 = vmatprep.subr.bf16.mxu0 0
        %996 = vmatpush1.bf16.msra.mxu0 0
        %997 = vmatprep.subr.bf16.mxu0 0
        %998 = vmatpush1.bf16.msra.mxu0 0
        %999 = vmatprep.subr.bf16.mxu0 0
        %1000 = vmatpush1.bf16.msra.mxu0 0
        %1001 = vmatprep.subr.bf16.mxu0 0
        %1002 = vmatpush1.bf16.msra.mxu0 0
        %1003 = vmatprep.subr.bf16.mxu0 0
        %1004 = vmatpush1.bf16.msra.mxu0 0
        %1005 = vmatprep.subr.bf16.mxu0 0
        %1006 = vmatpush1.bf16.msra.mxu0 0
        %1007 = vmatprep.subr.bf16.mxu0 0
        %1008 = vmatpush1.bf16.msra.mxu0 0
        %1009 = vmatprep.mubr.bf16.mxu0 0
        %1010 = vmatmul.mubr.bf16.gmra.mrb[0].mxu0 %v957
        %v1011 = vpop.f32.mrb[0].mxu0
        %v1012 = vadd.f32 %v551, %v1011
        %v1013 = vpop.f32.mrb[0].mxu0
        %v1014 = vpop.f32.mrb[0].mxu0
        %v1015 = vadd.f32 %v551, %v1014
        %v1016 = vpop.f32.mrb[0].mxu0
        %1017 = vmatprep.mubr.bf16.mxu0 0
        %1018 = vmatmul.mubr.bf16.gmra.mrb[0].mxu0 %v960
        %v1019 = vpop.f32.mrb[0].mxu0
        %v1020 = vadd.f32 %v551, %v1019
        %v1021 = vpop.f32.mrb[0].mxu0
        %v1022 = vpop.f32.mrb[0].mxu0
        %v1023 = vadd.f32 %v551, %v1022
        %v1024 = vpop.f32.mrb[0].mxu0
        %1025 = vmatprep.mubr.bf16.mxu0 0
        %1026 = vmatmul.mubr.bf16.gmra.mrb[0].mxu0 %v963
        %v1027 = vpop.f32.mrb[0].mxu0
        %v1028 = vadd.f32 %v551, %v1027
        %v1029 = vpop.f32.mrb[0].mxu0
        %v1030 = vpop.f32.mrb[0].mxu0
        %v1031 = vadd.f32 %v551, %v1030
        %v1032 = vpop.f32.mrb[0].mxu0
        %1033 = vmatprep.mubr.bf16.mxu0 0
        %1034 = vmatmul.mubr.bf16.gmra.mrb[0].mxu0 %v966
        %v1035 = vpop.f32.mrb[0].mxu0
        %v1036 = vadd.f32 %v551, %v1035
        %v1037 = vpop.f32.mrb[0].mxu0
        %v1038 = vpop.f32.mrb[0].mxu0
        %v1039 = vadd.f32 %v551, %v1038
        %v1040 = vpop.f32.mrb[0].mxu0
        %1041 = vmatprep.mubr.bf16.mxu0 0
        %1042 = vmatmul.mubr.bf16.gmra.mrb[0].mxu0 %v969
        %v1043 = vpop.f32.mrb[0].mxu0
        %v1044 = vadd.f32 %v551, %v1043
        %v1045 = vpop.f32.mrb[0].mxu0
        %v1046 = vpop.f32.mrb[0].mxu0
        %v1047 = vadd.f32 %v551, %v1046
        %v1048 = vpop.f32.mrb[0].mxu0
        %1049 = vmatprep.mubr.bf16.mxu0 0
        %1050 = vmatmul.mubr.bf16.gmra.mrb[0].mxu0 %v972
        %v1051 = vpop.f32.mrb[0].mxu0
        %v1052 = vadd.f32 %v551, %v1051
        %v1053 = vpop.f32.mrb[0].mxu0
        %v1054 = vpop.f32.mrb[0].mxu0
        %v1055 = vadd.f32 %v551, %v1054
        %v1056 = vpop.f32.mrb[0].mxu0
        %1057 = vmatprep.mubr.bf16.mxu0 0
        %1058 = vmatmul.mubr.bf16.gmra.mrb[0].mxu0 %v975
        %v1059 = vpop.f32.mrb[0].mxu0
        %v1060 = vadd.f32 %v551, %v1059
        %v1061 = vpop.f32.mrb[0].mxu0
        %v1062 = vpop.f32.mrb[0].mxu0
        %v1063 = vadd.f32 %v551, %v1062
        %v1064 = vpop.f32.mrb[0].mxu0
        %1065 = vdwg.mxu0
        %v1066 = vmax.f32 %v1012, 0.0
        %v1067 = vmax.f32 %v1015, 0.0
        %v1068 = vmax.f32 %v1020, 0.0
        %v1069 = vmax.f32 %v1023, 0.0
        %v1070 = vmax.f32 %v1028, 0.0
        %v1071 = vmax.f32 %v1031, 0.0
        %v1072 = vmax.f32 %v1036, 0.0
        %v1073 = vmax.f32 %v1039, 0.0
        %v1074 = vmax.f32 %v1044, 0.0
        %v1075 = vmax.f32 %v1047, 0.0
        %v1076 = vmax.f32 %v1052, 0.0
        %v1077 = vmax.f32 %v1055, 0.0
        %v1078 = vmax.f32 %v1060, 0.0
        %v1079 = vmax.f32 %v1063, 0.0
        %s1080 = scalar_lea.vmem %s477, 168 [#allocation2]
        %v1081 = vld [vmem:[%s1080] sm:$0xf]
        %v1082 = vld [vmem:[%s1080 + $0x4] sm:$0xf]
        %v1083 = vld [vmem:[%s1080 + $0x8] sm:$0xf]
        %v1084 = vld [vmem:[%s1080 + $0xc] sm:$0xf]
        %v1085 = vld [vmem:[%s1080 + $0x10] sm:$0xf]
        %v1086 = vld [vmem:[%s1080 + $0x14] sm:$0xf]
        %v1087 = vld [vmem:[%s1080 + $0x18] sm:$0xf]
        %v1088 = vld [vmem:[%s1080 + $0x1c] sm:$0xf]
        %v1089 = vld [vmem:[%s1080 + $0x20] sm:$0xf]
        %v1090 = vld [vmem:[%s1080 + $0x24] sm:$0xf]
        %v1091 = vld [vmem:[%s1080 + $0x28] sm:$0xf]
        %v1092 = vld [vmem:[%s1080 + $0x2c] sm:$0xf]
        %v1093 = vld [vmem:[%s1080 + $0x30] sm:$0xf]
        %v1094 = vld [vmem:[%s1080 + $0x34] sm:$0xf]
        %v1109 = vunpack.c.l.b16 %v1081
        %v1110 = vunpack.c.l.b16 %v1082
        %v1111 = vunpack.c.l.b16 %v1083
        %v1112 = vunpack.c.l.b16 %v1084
        %v1113 = vunpack.c.l.b16 %v1085
        %v1114 = vunpack.c.l.b16 %v1086
        %v1115 = vunpack.c.l.b16 %v1087
        %v1116 = vunpack.c.l.b16 %v1088
        %v1117 = vunpack.c.l.b16 %v1089
        %v1118 = vunpack.c.l.b16 %v1090
        %v1119 = vunpack.c.l.b16 %v1091
        %v1120 = vunpack.c.l.b16 %v1092
        %v1121 = vunpack.c.l.b16 %v1093
        %v1122 = vunpack.c.l.b16 %v1094
        %v1123 = vpack.c.b16 %v1110, %v1109
        %v1124 = vpack.c.b16 %v1112, %v1111
        %v1125 = vpack.c.b16 %v1114, %v1113
        %v1126 = vpack.c.b16 %v1116, %v1115
        %v1127 = vpack.c.b16 %v1118, %v1117
        %v1128 = vpack.c.b16 %v1120, %v1119
        %v1129 = vpack.c.b16 %v1122, %v1121
        %v1131 = vsel %vm603, %v1123, 0
        %v1134 = vsel %vm603, %v1124, 0
        %v1137 = vsel %vm603, %v1125, 0
        %v1140 = vsel %vm603, %v1126, 0
        %v1143 = vsel %vm603, %v1127, 0
        %v1146 = vsel %vm603, %v1128, 0
        %v1149 = vsel %vm603, %v1129, 0
        %1151 = vmatprep.subr.bf16.mxu0 0
        %1152 = vmatpush1.bf16.msra.mxu0 %v598
        %1153 = vmatprep.subr.bf16.mxu0 0
        %1154 = vmatpush1.bf16.msra.mxu0 %v599
        %1155 = vmatprep.subr.bf16.mxu0 0
        %1156 = vmatpush1.bf16.msra.mxu0 %v627
        %1157 = vmatprep.subr.bf16.mxu0 0
        %1158 = vmatpush1.bf16.msra.mxu0 0
        %1159 = vmatprep.subr.bf16.mxu0 0
        %1160 = vmatpush1.bf16.msra.mxu0 0
        %1161 = vmatprep.subr.bf16.mxu0 0
        %1162 = vmatpush1.bf16.msra.mxu0 0
        %1163 = vmatprep.subr.bf16.mxu0 0
        %1164 = vmatpush1.bf16.msra.mxu0 0
        %1165 = vmatprep.subr.bf16.mxu0 0
        %1166 = vmatpush1.bf16.msra.mxu0 0
        %1167 = vmatprep.subr.bf16.mxu0 0
        %1168 = vmatpush1.bf16.msra.mxu0 0
        %1169 = vmatprep.subr.bf16.mxu0 0
        %1170 = vmatpush1.bf16.msra.mxu0 0
        %1171 = vmatprep.subr.bf16.mxu0 0
        %1172 = vmatpush1.bf16.msra.mxu0 0
        %1173 = vmatprep.subr.bf16.mxu0 0
        %1174 = vmatpush1.bf16.msra.mxu0 0
        %1175 = vmatprep.subr.bf16.mxu0 0
        %1176 = vmatpush1.bf16.msra.mxu0 0
        %1177 = vmatprep.subr.bf16.mxu0 0
        %1178 = vmatpush1.bf16.msra.mxu0 0
        %1179 = vmatprep.subr.bf16.mxu0 0
        %1180 = vmatpush1.bf16.msra.mxu0 0
        %1181 = vmatprep.subr.bf16.mxu0 0
        %1182 = vmatpush1.bf16.msra.mxu0 0
        %1183 = vmatprep.mubr.bf16.mxu0 0
        %1184 = vmatmul.mubr.bf16.gmra.mrb[0].mxu0 %v1131
        %v1185 = vpop.f32.mrb[0].mxu0
        %v1186 = vadd.f32 %v551, %v1185
        %v1187 = vpop.f32.mrb[0].mxu0
        %v1188 = vpop.f32.mrb[0].mxu0
        %v1189 = vadd.f32 %v551, %v1188
        %v1190 = vpop.f32.mrb[0].mxu0
        %1191 = vmatprep.mubr.bf16.mxu0 0
        %1192 = vmatmul.mubr.bf16.gmra.mrb[0].mxu0 %v1134
        %v1193 = vpop.f32.mrb[0].mxu0
        %v1194 = vadd.f32 %v551, %v1193
        %v1195 = vpop.f32.mrb[0].mxu0
        %v1196 = vpop.f32.mrb[0].mxu0
        %v1197 = vadd.f32 %v551, %v1196
        %v1198 = vpop.f32.mrb[0].mxu0
        %1199 = vmatprep.mubr.bf16.mxu0 0
        %1200 = vmatmul.mubr.bf16.gmra.mrb[0].mxu0 %v1137
        %v1201 = vpop.f32.mrb[0].mxu0
        %v1202 = vadd.f32 %v551, %v1201
        %v1203 = vpop.f32.mrb[0].mxu0
        %v1204 = vpop.f32.mrb[0].mxu0
        %v1205 = vadd.f32 %v551, %v1204
        %v1206 = vpop.f32.mrb[0].mxu0
        %1207 = vmatprep.mubr.bf16.mxu0 0
        %1208 = vmatmul.mubr.bf16.gmra.mrb[0].mxu0 %v1140
        %v1209 = vpop.f32.mrb[0].mxu0
        %v1210 = vadd.f32 %v551, %v1209
        %v1211 = vpop.f32.mrb[0].mxu0
        %v1212 = vpop.f32.mrb[0].mxu0
        %v1213 = vadd.f32 %v551, %v1212
        %v1214 = vpop.f32.mrb[0].mxu0
        %1215 = vmatprep.mubr.bf16.mxu0 0
        %1216 = vmatmul.mubr.bf16.gmra.mrb[0].mxu0 %v1143
        %v1217 = vpop.f32.mrb[0].mxu0
        %v1218 = vadd.f32 %v551, %v1217
        %v1219 = vpop.f32.mrb[0].mxu0
        %v1220 = vpop.f32.mrb[0].mxu0
        %v1221 = vadd.f32 %v551, %v1220
        %v1222 = vpop.f32.mrb[0].mxu0
        %1223 = vmatprep.mubr.bf16.mxu0 0
        %1224 = vmatmul.mubr.bf16.gmra.mrb[0].mxu0 %v1146
        %v1225 = vpop.f32.mrb[0].mxu0
        %v1226 = vadd.f32 %v551, %v1225
        %v1227 = vpop.f32.mrb[0].mxu0
        %v1228 = vpop.f32.mrb[0].mxu0
        %v1229 = vadd.f32 %v551, %v1228
        %v1230 = vpop.f32.mrb[0].mxu0
        %1231 = vmatprep.mubr.bf16.mxu0 0
        %1232 = vmatmul.mubr.bf16.gmra.mrb[0].mxu0 %v1149
        %v1233 = vpop.f32.mrb[0].mxu0
        %v1234 = vadd.f32 %v551, %v1233
        %v1235 = vpop.f32.mrb[0].mxu0
        %v1236 = vpop.f32.mrb[0].mxu0
        %v1237 = vadd.f32 %v551, %v1236
        %v1238 = vpop.f32.mrb[0].mxu0
        %1239 = vdwg.mxu0
        %v1240 = vmax.f32 %v1186, 0.0
        %v1241 = vmax.f32 %v1189, 0.0
        %v1242 = vmax.f32 %v1194, 0.0
        %v1243 = vmax.f32 %v1197, 0.0
        %v1244 = vmax.f32 %v1202, 0.0
        %v1245 = vmax.f32 %v1205, 0.0
        %v1246 = vmax.f32 %v1210, 0.0
        %v1247 = vmax.f32 %v1213, 0.0
        %v1248 = vmax.f32 %v1218, 0.0
        %v1249 = vmax.f32 %v1221, 0.0
        %v1250 = vmax.f32 %v1226, 0.0
        %v1251 = vmax.f32 %v1229, 0.0
        %v1252 = vmax.f32 %v1234, 0.0
        %v1253 = vmax.f32 %v1237, 0.0
        %v1254 = vmax.f32 %v718, %v892
        %v1255 = vmax.f32 %v719, %v893
        %v1256 = vmax.f32 %v720, %v894
        %v1257 = vmax.f32 %v721, %v895
        %v1258 = vmax.f32 %v722, %v896
        %v1259 = vmax.f32 %v723, %v897
        %v1260 = vmax.f32 %v724, %v898
        %v1261 = vmax.f32 %v725, %v899
        %v1262 = vmax.f32 %v726, %v900
        %v1263 = vmax.f32 %v727, %v901
        %v1264 = vmax.f32 %v728, %v902
        %v1265 = vmax.f32 %v729, %v903
        %v1266 = vmax.f32 %v730, %v904
        %v1267 = vmax.f32 %v731, %v905
        %v1268 = vmax.f32 %v1066, %v1240
        %v1269 = vmax.f32 %v1067, %v1241
        %v1270 = vmax.f32 %v1068, %v1242
        %v1271 = vmax.f32 %v1069, %v1243
        %v1272 = vmax.f32 %v1070, %v1244
        %v1273 = vmax.f32 %v1071, %v1245
        %v1274 = vmax.f32 %v1072, %v1246
        %v1275 = vmax.f32 %v1073, %v1247
        %v1276 = vmax.f32 %v1074, %v1248
        %v1277 = vmax.f32 %v1075, %v1249
        %v1278 = vmax.f32 %v1076, %v1250
        %v1279 = vmax.f32 %v1077, %v1251
        %v1280 = vmax.f32 %v1078, %v1252
        %v1281 = vmax.f32 %v1079, %v1253
        %v1282 = vmax.f32 %v1254, %v1268
        %v1283 = vmax.f32 %v1255, %v1269
        %v1284 = vmax.f32 %v1256, %v1270
        %v1285 = vmax.f32 %v1257, %v1271
        %v1286 = vmax.f32 %v1258, %v1272
        %v1287 = vmax.f32 %v1259, %v1273
        %v1288 = vmax.f32 %v1260, %v1274
        %v1289 = vmax.f32 %v1261, %v1275
        %v1290 = vmax.f32 %v1262, %v1276
        %v1291 = vmax.f32 %v1263, %v1277
        %v1292 = vmax.f32 %v1264, %v1278
        %v1293 = vmax.f32 %v1265, %v1279
        %v1294 = vmax.f32 %v1266, %v1280
        %v1295 = vmax.f32 %v1267, %v1281
        %v1296 = vmin.f32 %v718, %v892
        %v1297 = vmin.f32 %v719, %v893
        %v1298 = vmin.f32 %v720, %v894
        %v1299 = vmin.f32 %v721, %v895
        %v1300 = vmin.f32 %v722, %v896
        %v1301 = vmin.f32 %v723, %v897
        %v1302 = vmin.f32 %v724, %v898
        %v1303 = vmin.f32 %v725, %v899
        %v1304 = vmin.f32 %v726, %v900
        %v1305 = vmin.f32 %v727, %v901
        %v1306 = vmin.f32 %v728, %v902
        %v1307 = vmin.f32 %v729, %v903
        %v1308 = vmin.f32 %v730, %v904
        %v1309 = vmin.f32 %v731, %v905
        %v1310 = vmin.f32 %v1066, %v1240
        %v1311 = vmin.f32 %v1067, %v1241
        %v1312 = vmin.f32 %v1068, %v1242
        %v1313 = vmin.f32 %v1069, %v1243
        %v1314 = vmin.f32 %v1070, %v1244
        %v1315 = vmin.f32 %v1071, %v1245
        %v1316 = vmin.f32 %v1072, %v1246
        %v1317 = vmin.f32 %v1073, %v1247
        %v1318 = vmin.f32 %v1074, %v1248
        %v1319 = vmin.f32 %v1075, %v1249
        %v1320 = vmin.f32 %v1076, %v1250
        %v1321 = vmin.f32 %v1077, %v1251
        %v1322 = vmin.f32 %v1078, %v1252
        %v1323 = vmin.f32 %v1079, %v1253
        %v1324 = vmin.f32 %v1296, %v1310
        %v1325 = vmin.f32 %v1297, %v1311
        %v1326 = vmin.f32 %v1298, %v1312
        %v1327 = vmin.f32 %v1299, %v1313
        %v1328 = vmin.f32 %v1300, %v1314
        %v1329 = vmin.f32 %v1301, %v1315
        %v1330 = vmin.f32 %v1302, %v1316
        %v1331 = vmin.f32 %v1303, %v1317
        %v1332 = vmin.f32 %v1304, %v1318
        %v1333 = vmin.f32 %v1305, %v1319
        %v1334 = vmin.f32 %v1306, %v1320
        %v1335 = vmin.f32 %v1307, %v1321
        %v1336 = vmin.f32 %v1308, %v1322
        %v1337 = vmin.f32 %v1309, %v1323
        %v1338 = vld [vmem:[%s3] sm:$0x1]
        %vm1339 = vcmp.ge.f32.partialorder %v1338, 0.0
        %v1340 = vsel %vm1339, 1, 0
        %v1341 = vlaneseq
        %v1342 = vshrl.u32 %v1341, 7
        %v1343 = vsub.s32 0, %v1342
        %v1344 = vrot.slane %v1340, %v1343
        %vm1345 = vcmp.eq.s32.totalorder %v1344, 1
        %v1346 = vsel %vm1345, %v1282, %v1324
        %v1347 = vsel %vm1345, %v1283, %v1325
        %v1348 = vsel %vm1345, %v1284, %v1326
        %v1349 = vsel %vm1345, %v1285, %v1327
        %v1350 = vsel %vm1345, %v1286, %v1328
        %v1351 = vsel %vm1345, %v1287, %v1329
        %v1352 = vsel %vm1345, %v1288, %v1330
        %v1353 = vsel %vm1345, %v1289, %v1331
        %v1354 = vsel %vm1345, %v1290, %v1332
        %v1355 = vsel %vm1345, %v1291, %v1333
        %v1356 = vsel %vm1345, %v1292, %v1334
        %v1357 = vsel %vm1345, %v1293, %v1335
        %v1358 = vsel %vm1345, %v1294, %v1336
        %v1359 = vsel %vm1345, %v1295, %v1337
        %v1360 = vpack.c.bf16 %v1347, %v1346
        %v1361 = vpack.c.bf16 %v1349, %v1348
        %v1362 = vpack.c.bf16 %v1351, %v1350
        %v1363 = vpack.c.bf16 %v1353, %v1352
        %v1364 = vpack.c.bf16 %v1355, %v1354
        %v1365 = vpack.c.bf16 %v1357, %v1356
        %v1366 = vpack.c.bf16 %v1359, %v1358
        %v1374 = vunpack.c.l.b16 %v1360
        %v1375 = vunpack.c.h.b16 %v1360
        %v1376 = vunpack.c.l.b16 %v1361
        %v1377 = vunpack.c.h.b16 %v1361
        %v1378 = vunpack.c.l.b16 %v1362
        %v1379 = vunpack.c.h.b16 %v1362
        %v1380 = vunpack.c.l.b16 %v1363
        %v1381 = vunpack.c.h.b16 %v1363
        %v1382 = vunpack.c.l.b16 %v1364
        %v1383 = vunpack.c.h.b16 %v1364
        %v1384 = vunpack.c.l.b16 %v1365
        %v1385 = vunpack.c.h.b16 %v1365
        %v1386 = vunpack.c.l.b16 %v1366
        %v1387 = vunpack.c.h.b16 %v1366
        %v1388 = vpack.c.b16 %v1374, %v1374
        %v1389 = vpack.c.b16 %v1375, %v1375
        %v1390 = vpack.c.b16 %v1376, %v1376
        %v1391 = vpack.c.b16 %v1377, %v1377
        %v1392 = vpack.c.b16 %v1378, %v1378
        %v1393 = vpack.c.b16 %v1379, %v1379
        %v1394 = vpack.c.b16 %v1380, %v1380
        %v1395 = vpack.c.b16 %v1381, %v1381
        %v1396 = vpack.c.b16 %v1382, %v1382
        %v1397 = vpack.c.b16 %v1383, %v1383
        %v1398 = vpack.c.b16 %v1384, %v1384
        %v1399 = vpack.c.b16 %v1385, %v1385
        %v1400 = vpack.c.b16 %v1386, %v1386
        %v1401 = vpack.c.b16 %v1387, %v1387
        %1416 = vst [vmem:[%s514] sm:$0xf] %v1388
        %1417 = vst [vmem:[%s514 + $0x4] sm:$0xf] %v1389
        %1418 = vst [vmem:[%s514 + $0x8] sm:$0xf] %v1390
        %1419 = vst [vmem:[%s514 + $0xc] sm:$0xf] %v1391
        %1420 = vst [vmem:[%s514 + $0x10] sm:$0xf] %v1392
        %1421 = vst [vmem:[%s514 + $0x14] sm:$0xf] %v1393
        %1422 = vst [vmem:[%s514 + $0x18] sm:$0xf] %v1394
        %1423 = vst [vmem:[%s514 + $0x1c] sm:$0xf] %v1395
        %1424 = vst [vmem:[%s514 + $0x20] sm:$0xf] %v1396
        %1425 = vst [vmem:[%s514 + $0x24] sm:$0xf] %v1397
        %1426 = vst [vmem:[%s514 + $0x28] sm:$0xf] %v1398
        %1427 = vst [vmem:[%s514 + $0x2c] sm:$0xf] %v1399
        %1428 = vst [vmem:[%s514 + $0x30] sm:$0xf] %v1400
        %1429 = vst [vmem:[%s514 + $0x34] sm:$0xf] %v1401
        %v1430 = vadd.f32 %v718, %v892
        %v1431 = vadd.f32 %v719, %v893
        %v1432 = vadd.f32 %v720, %v894
        %v1433 = vadd.f32 %v721, %v895
        %v1434 = vadd.f32 %v722, %v896
        %v1435 = vadd.f32 %v723, %v897
        %v1436 = vadd.f32 %v724, %v898
        %v1437 = vadd.f32 %v725, %v899
        %v1438 = vadd.f32 %v726, %v900
        %v1439 = vadd.f32 %v727, %v901
        %v1440 = vadd.f32 %v728, %v902
        %v1441 = vadd.f32 %v729, %v903
        %v1442 = vadd.f32 %v730, %v904
        %v1443 = vadd.f32 %v731, %v905
        %v1444 = vadd.f32 %v1066, %v1240
        %v1445 = vadd.f32 %v1067, %v1241
        %v1446 = vadd.f32 %v1068, %v1242
        %v1447 = vadd.f32 %v1069, %v1243
        %v1448 = vadd.f32 %v1070, %v1244
        %v1449 = vadd.f32 %v1071, %v1245
        %v1450 = vadd.f32 %v1072, %v1246
        %v1451 = vadd.f32 %v1073, %v1247
        %v1452 = vadd.f32 %v1074, %v1248
        %v1453 = vadd.f32 %v1075, %v1249
        %v1454 = vadd.f32 %v1076, %v1250
        %v1455 = vadd.f32 %v1077, %v1251
        %v1456 = vadd.f32 %v1078, %v1252
        %v1457 = vadd.f32 %v1079, %v1253
        %v1458 = vadd.f32 %v1430, %v1444
        %v1459 = vadd.f32 %v1431, %v1445
        %v1460 = vadd.f32 %v1432, %v1446
        %v1461 = vadd.f32 %v1433, %v1447
        %v1462 = vadd.f32 %v1434, %v1448
        %v1463 = vadd.f32 %v1435, %v1449
        %v1464 = vadd.f32 %v1436, %v1450
        %v1465 = vadd.f32 %v1437, %v1451
        %v1466 = vadd.f32 %v1438, %v1452
        %v1467 = vadd.f32 %v1439, %v1453
        %v1468 = vadd.f32 %v1440, %v1454
        %v1469 = vadd.f32 %v1441, %v1455
        %v1470 = vadd.f32 %v1442, %v1456
        %v1471 = vadd.f32 %v1443, %v1457
        %v1472 = vmul.f32 %v718, %v718
        %v1473 = vmul.f32 %v719, %v719
        %v1474 = vmul.f32 %v720, %v720
        %v1475 = vmul.f32 %v721, %v721
        %v1476 = vmul.f32 %v722, %v722
        %v1477 = vmul.f32 %v723, %v723
        %v1478 = vmul.f32 %v724, %v724
        %v1479 = vmul.f32 %v725, %v725
        %v1480 = vmul.f32 %v726, %v726
        %v1481 = vmul.f32 %v727, %v727
        %v1482 = vmul.f32 %v728, %v728
        %v1483 = vmul.f32 %v729, %v729
        %v1484 = vmul.f32 %v730, %v730
        %v1485 = vmul.f32 %v731, %v731
        %v1486 = vmul.f32 %v892, %v892
        %v1487 = vmul.f32 %v893, %v893
        %v1488 = vmul.f32 %v894, %v894
        %v1489 = vmul.f32 %v895, %v895
        %v1490 = vmul.f32 %v896, %v896
        %v1491 = vmul.f32 %v897, %v897
        %v1492 = vmul.f32 %v898, %v898
        %v1493 = vmul.f32 %v899, %v899
        %v1494 = vmul.f32 %v900, %v900
        %v1495 = vmul.f32 %v901, %v901
        %v1496 = vmul.f32 %v902, %v902
        %v1497 = vmul.f32 %v903, %v903
        %v1498 = vmul.f32 %v904, %v904
        %v1499 = vmul.f32 %v905, %v905
        %v1500 = vadd.f32 %v1472, %v1486
        %v1501 = vadd.f32 %v1473, %v1487
        %v1502 = vadd.f32 %v1474, %v1488
        %v1503 = vadd.f32 %v1475, %v1489
        %v1504 = vadd.f32 %v1476, %v1490
        %v1505 = vadd.f32 %v1477, %v1491
        %v1506 = vadd.f32 %v1478, %v1492
        %v1507 = vadd.f32 %v1479, %v1493
        %v1508 = vadd.f32 %v1480, %v1494
        %v1509 = vadd.f32 %v1481, %v1495
        %v1510 = vadd.f32 %v1482, %v1496
        %v1511 = vadd.f32 %v1483, %v1497
        %v1512 = vadd.f32 %v1484, %v1498
        %v1513 = vadd.f32 %v1485, %v1499
        %v1514 = vmul.f32 %v1066, %v1066
        %v1515 = vmul.f32 %v1067, %v1067
        %v1516 = vmul.f32 %v1068, %v1068
        %v1517 = vmul.f32 %v1069, %v1069
        %v1518 = vmul.f32 %v1070, %v1070
        %v1519 = vmul.f32 %v1071, %v1071
        %v1520 = vmul.f32 %v1072, %v1072
        %v1521 = vmul.f32 %v1073, %v1073
        %v1522 = vmul.f32 %v1074, %v1074
        %v1523 = vmul.f32 %v1075, %v1075
        %v1524 = vmul.f32 %v1076, %v1076
        %v1525 = vmul.f32 %v1077, %v1077
        %v1526 = vmul.f32 %v1078, %v1078
        %v1527 = vmul.f32 %v1079, %v1079
        %v1528 = vmul.f32 %v1240, %v1240
        %v1529 = vmul.f32 %v1241, %v1241
        %v1530 = vmul.f32 %v1242, %v1242
        %v1531 = vmul.f32 %v1243, %v1243
        %v1532 = vmul.f32 %v1244, %v1244
        %v1533 = vmul.f32 %v1245, %v1245
        %v1534 = vmul.f32 %v1246, %v1246
        %v1535 = vmul.f32 %v1247, %v1247
        %v1536 = vmul.f32 %v1248, %v1248
        %v1537 = vmul.f32 %v1249, %v1249
        %v1538 = vmul.f32 %v1250, %v1250
        %v1539 = vmul.f32 %v1251, %v1251
        %v1540 = vmul.f32 %v1252, %v1252
        %v1541 = vmul.f32 %v1253, %v1253
        %v1542 = vadd.f32 %v1514, %v1528
        %v1543 = vadd.f32 %v1515, %v1529
        %v1544 = vadd.f32 %v1516, %v1530
        %v1545 = vadd.f32 %v1517, %v1531
        %v1546 = vadd.f32 %v1518, %v1532
        %v1547 = vadd.f32 %v1519, %v1533
        %v1548 = vadd.f32 %v1520, %v1534
        %v1549 = vadd.f32 %v1521, %v1535
        %v1550 = vadd.f32 %v1522, %v1536
        %v1551 = vadd.f32 %v1523, %v1537
        %v1552 = vadd.f32 %v1524, %v1538
        %v1553 = vadd.f32 %v1525, %v1539
        %v1554 = vadd.f32 %v1526, %v1540
        %v1555 = vadd.f32 %v1527, %v1541
        %v1556 = vadd.f32 %v1500, %v1542
        %v1557 = vadd.f32 %v1501, %v1543
        %v1558 = vadd.f32 %v1502, %v1544
        %v1559 = vadd.f32 %v1503, %v1545
        %v1560 = vadd.f32 %v1504, %v1546
        %v1561 = vadd.f32 %v1505, %v1547
        %v1562 = vadd.f32 %v1506, %v1548
        %v1563 = vadd.f32 %v1507, %v1549
        %v1564 = vadd.f32 %v1508, %v1550
        %v1565 = vadd.f32 %v1509, %v1551
        %v1566 = vadd.f32 %v1510, %v1552
        %v1567 = vadd.f32 %v1511, %v1553
        %v1568 = vadd.f32 %v1512, %v1554
        %v1569 = vadd.f32 %v1513, %v1555
        %s1570 = sadd.s32 %s21, %s22
        %s1571 = smul.u32 %s1570, 112
        %s1572 = ssub.s32 98, %s1571
        %p1573 = scmp.ge.s32.totalorder %s1572, 112
        // Predicated region
        $region82: #{conv_block_forward.2} parent=72 // pred_check
          %p1574 = pneg %p1573
        $region83: #{conv_block_forward.2} parent=72 // pred_check_branch
          %1576 = sbr.rel (%p1574) target = $region85
        $region84: #{conv_block_forward.2} parent=72 // pred_region
          %v1577 = vadd.f32 %v1458, %v1459
          %v1578 = vadd.f32 %v1577, %v1460
          %v1579 = vadd.f32 %v1578, %v1461
          %v1580 = vadd.f32 %v1579, %v1462
          %v1581 = vadd.f32 %v1580, %v1463
          %v1582 = vadd.f32 %v1581, %v1464
          %v1583 = vadd.f32 %v1582, %v1465
          %v1584 = vadd.f32 %v1583, %v1466
          %v1585 = vadd.f32 %v1584, %v1467
          %v1586 = vadd.f32 %v1585, %v1468
          %v1587 = vadd.f32 %v1586, %v1469
          %v1588 = vadd.f32 %v1587, %v1470
          %v1589 = vadd.f32 %v1588, %v1471
          %v1590 = vrot.slane %v1589, 4
          %v1591 = vadd.f32 %v1589, %v1590
          %v1592 = vrot.slane %v1591, 2
          %v1593 = vadd.f32 %v1591, %v1592
          %v1594 = vrot.slane %v1593, 1
          %v1595 = vadd.f32 %v1593, %v1594
          %v1596 = vadd.f32 %v1556, %v1557
          %v1597 = vadd.f32 %v1596, %v1558
          %v1598 = vadd.f32 %v1597, %v1559
          %v1599 = vadd.f32 %v1598, %v1560
          %v1600 = vadd.f32 %v1599, %v1561
          %v1601 = vadd.f32 %v1600, %v1562
          %v1602 = vadd.f32 %v1601, %v1563
          %v1603 = vadd.f32 %v1602, %v1564
          %v1604 = vadd.f32 %v1603, %v1565
          %v1605 = vadd.f32 %v1604, %v1566
          %v1606 = vadd.f32 %v1605, %v1567
          %v1607 = vadd.f32 %v1606, %v1568
          %v1608 = vadd.f32 %v1607, %v1569
          %v1609 = vrot.slane %v1608, 4
          %v1610 = vadd.f32 %v1608, %v1609
          %v1611 = vrot.slane %v1610, 2
          %v1612 = vadd.f32 %v1610, %v1611
          %v1613 = vrot.slane %v1612, 1
          %v1614 = vadd.f32 %v1612, %v1613
          %v1615 = vld [vmem:[%s520] sm:$0x3]
          %vm1616 = vcmask 1040384
          %v1617 = vsel %vm1616, %v1595, %v1614
          %v1618 = vadd.f32 %v1615, %v1617
          %1619 = vst [vmem:[%s520] sm:$0x3] %v1618
        $region85: #{conv_block_forward.2} parent=72 // pred_fallthru
          _
        %p1620 = scmp.lt.s32.totalorder %s1572, 112
        // Predicated region
        $region86: #{conv_block_forward.2} parent=72 // pred_check
          %p1621 = pneg %p1620
        $region87: #{conv_block_forward.2} parent=72 // pred_check_branch
          %1623 = sbr.rel (%p1621) target = $region89
        $region88: #{conv_block_forward.2} parent=72 // pred_region
          %v1624 = vlaneseq
          %v1625 = vshrl.u32 %v1624, 7
          %v1626 = vadd.s32 %v1625, 8
          %v1627 = vadd.s32 %v1625, 16
          %v1628 = vadd.s32 %v1625, 24
          %v1629 = vadd.s32 %v1625, 32
          %v1630 = vadd.s32 %v1625, 40
          %v1631 = vadd.s32 %v1625, 48
          %v1632 = vadd.s32 %v1625, 56
          %v1633 = vadd.s32 %v1625, 64
          %v1634 = vadd.s32 %v1625, 72
          %v1635 = vadd.s32 %v1625, 80
          %v1636 = vadd.s32 %v1625, 88
          %v1637 = vadd.s32 %v1625, 96
          %v1638 = vadd.s32 %v1625, 104
          %v1639 = vstv %s1572
          %vm1640 = vcmp.lt.s32.totalorder %v1625, %v1639
          %vm1641 = vcmp.lt.s32.totalorder %v1626, %v1639
          %vm1642 = vcmp.lt.s32.totalorder %v1627, %v1639
          %vm1643 = vcmp.lt.s32.totalorder %v1628, %v1639
          %vm1644 = vcmp.lt.s32.totalorder %v1629, %v1639
          %vm1645 = vcmp.lt.s32.totalorder %v1630, %v1639
          %vm1646 = vcmp.lt.s32.totalorder %v1631, %v1639
          %vm1647 = vcmp.lt.s32.totalorder %v1632, %v1639
          %vm1648 = vcmp.lt.s32.totalorder %v1633, %v1639
          %vm1649 = vcmp.lt.s32.totalorder %v1634, %v1639
          %vm1650 = vcmp.lt.s32.totalorder %v1635, %v1639
          %vm1651 = vcmp.lt.s32.totalorder %v1636, %v1639
          %vm1652 = vcmp.lt.s32.totalorder %v1637, %v1639
          %vm1653 = vcmp.lt.s32.totalorder %v1638, %v1639
          %v1654 = vsel %vm1640, 1, 0
          %v1655 = vsel %vm1641, 1, 0
          %v1656 = vsel %vm1642, 1, 0
          %v1657 = vsel %vm1643, 1, 0
          %v1658 = vsel %vm1644, 1, 0
          %v1659 = vsel %vm1645, 1, 0
          %v1660 = vsel %vm1646, 1, 0
          %v1661 = vsel %vm1647, 1, 0
          %v1662 = vsel %vm1648, 1, 0
          %v1663 = vsel %vm1649, 1, 0
          %v1664 = vsel %vm1650, 1, 0
          %v1665 = vsel %vm1651, 1, 0
          %v1666 = vsel %vm1652, 1, 0
          %v1667 = vsel %vm1653, 1, 0
          %vm1668 = vcmp.eq.s32.totalorder %v1654, 1
          %vm1669 = vcmp.eq.s32.totalorder %v1655, 1
          %vm1670 = vcmp.eq.s32.totalorder %v1656, 1
          %vm1671 = vcmp.eq.s32.totalorder %v1657, 1
          %vm1672 = vcmp.eq.s32.totalorder %v1658, 1
          %vm1673 = vcmp.eq.s32.totalorder %v1659, 1
          %vm1674 = vcmp.eq.s32.totalorder %v1660, 1
          %vm1675 = vcmp.eq.s32.totalorder %v1661, 1
          %vm1676 = vcmp.eq.s32.totalorder %v1662, 1
          %vm1677 = vcmp.eq.s32.totalorder %v1663, 1
          %vm1678 = vcmp.eq.s32.totalorder %v1664, 1
          %vm1679 = vcmp.eq.s32.totalorder %v1665, 1
          %vm1680 = vcmp.eq.s32.totalorder %v1666, 1
          %vm1681 = vcmp.eq.s32.totalorder %v1667, 1
          %v1682 = vsel %vm1668, %v1458, 0.0
          %v1683 = vsel %vm1669, %v1459, 0.0
          %v1684 = vsel %vm1670, %v1460, 0.0
          %v1685 = vsel %vm1671, %v1461, 0.0
          %v1686 = vsel %vm1672, %v1462, 0.0
          %v1687 = vsel %vm1673, %v1463, 0.0
          %v1688 = vsel %vm1674, %v1464, 0.0
          %v1689 = vsel %vm1675, %v1465, 0.0
          %v1690 = vsel %vm1676, %v1466, 0.0
          %v1691 = vsel %vm1677, %v1467, 0.0
          %v1692 = vsel %vm1678, %v1468, 0.0
          %v1693 = vsel %vm1679, %v1469, 0.0
          %v1694 = vsel %vm1680, %v1470, 0.0
          %v1695 = vsel %vm1681, %v1471, 0.0
          %v1696 = vsel %vm1668, %v1556, 0.0
          %v1697 = vsel %vm1669, %v1557, 0.0
          %v1698 = vsel %vm1670, %v1558, 0.0
          %v1699 = vsel %vm1671, %v1559, 0.0
          %v1700 = vsel %vm1672, %v1560, 0.0
          %v1701 = vsel %vm1673, %v1561, 0.0
          %v1702 = vsel %vm1674, %v1562, 0.0
          %v1703 = vsel %vm1675, %v1563, 0.0
          %v1704 = vsel %vm1676, %v1564, 0.0
          %v1705 = vsel %vm1677, %v1565, 0.0
          %v1706 = vsel %vm1678, %v1566, 0.0
          %v1707 = vsel %vm1679, %v1567, 0.0
          %v1708 = vsel %vm1680, %v1568, 0.0
          %v1709 = vsel %vm1681, %v1569, 0.0
          %v1710 = vadd.f32 %v1682, %v1683
          %v1711 = vadd.f32 %v1710, %v1684
          %v1712 = vadd.f32 %v1711, %v1685
          %v1713 = vadd.f32 %v1712, %v1686
          %v1714 = vadd.f32 %v1713, %v1687
          %v1715 = vadd.f32 %v1714, %v1688
          %v1716 = vadd.f32 %v1715, %v1689
          %v1717 = vadd.f32 %v1716, %v1690
          %v1718 = vadd.f32 %v1717, %v1691
          %v1719 = vadd.f32 %v1718, %v1692
          %v1720 = vadd.f32 %v1719, %v1693
          %v1721 = vadd.f32 %v1720, %v1694
          %v1722 = vadd.f32 %v1721, %v1695
          %v1723 = vrot.slane %v1722, 4
          %v1724 = vadd.f32 %v1722, %v1723
          %v1725 = vrot.slane %v1724, 2
          %v1726 = vadd.f32 %v1724, %v1725
          %v1727 = vrot.slane %v1726, 1
          %v1728 = vadd.f32 %v1726, %v1727
          %v1729 = vadd.f32 %v1696, %v1697
          %v1730 = vadd.f32 %v1729, %v1698
          %v1731 = vadd.f32 %v1730, %v1699
          %v1732 = vadd.f32 %v1731, %v1700
          %v1733 = vadd.f32 %v1732, %v1701
          %v1734 = vadd.f32 %v1733, %v1702
          %v1735 = vadd.f32 %v1734, %v1703
          %v1736 = vadd.f32 %v1735, %v1704
          %v1737 = vadd.f32 %v1736, %v1705
          %v1738 = vadd.f32 %v1737, %v1706
          %v1739 = vadd.f32 %v1738, %v1707
          %v1740 = vadd.f32 %v1739, %v1708
          %v1741 = vadd.f32 %v1740, %v1709
          %v1742 = vrot.slane %v1741, 4
          %v1743 = vadd.f32 %v1741, %v1742
          %v1744 = vrot.slane %v1743, 2
          %v1745 = vadd.f32 %v1743, %v1744
          %v1746 = vrot.slane %v1745, 1
          %v1747 = vadd.f32 %v1745, %v1746
          %v1748 = vld [vmem:[%s520] sm:$0x3]
          %vm1749 = vcmask 1040384
          %v1750 = vsel %vm1749, %v1728, %v1747
          %v1751 = vadd.f32 %v1748, %v1750
          %1752 = vst [vmem:[%s520] sm:$0x3] %v1751
        $region89: #{conv_block_forward.2} parent=72 // pred_fallthru
          _
        %s1753 = sadd.s32 %s21, %s22
        %s1754 = smul.u32 14, %s1753
        %p1755 = scmp.lt.s32.totalorder %s1754, 27
        %s1756 = scalar_select %p1755, %s1754, 27
        %s1757 = smul.addr %s1756, 4
        %s1758 = scalar_lea.vmem %s4, %s1757
        %p1759 = scmp.lt.s32.totalorder %s21, 1
        %s1760 = scalar_select %p1759, %s21, 1
        %s1761 = smul.addr %s1760, 2
        %s1762 = scalar_lea.vmem %s5, %s1761
        // Predicated region
        $region90: #{conv_block_forward.2} parent=72 // pred_check
          %p1763 = pneg %p140
        $region91: #{conv_block_forward.2} parent=72 // pred_check_branch
          %1765 = sbr.rel (%p1763) target = $region93
        $region92: #{conv_block_forward.2} parent=72 // pred_region
          %s1766 = sadd.s32 %s21, %s22
          %s1767 = smul.u32 14, %s1766
        $region93: #{conv_block_forward.2} parent=72 // pred_fallthru
          _
        // Predicated region
        $region94: #{conv_block_forward.2} parent=72 // pred_check
          %p1768 = pneg %p166
        $region95: #{conv_block_forward.2} parent=72 // pred_check_branch
          %1770 = sbr.rel (%p1768) target = $region97
        $region96: #{conv_block_forward.2} parent=72 // pred_region
          _
        $region97: #{conv_block_forward.2} parent=72 // pred_fallthru
          _
      $region73: #{conv_block_forward.2} parent=5 // pred_fallthru
        _
      %p1771 = scmp.le.s32.totalorder 2, %s12
      // Predicated region
      $region98: #{conv_block_forward.2} parent=5 // pred_check
        %p1772 = pneg %p1771
      $region99: #{conv_block_forward.2} parent=5 // pred_check_branch
        %1774 = sbr.rel (%p1772) target = $region101
      $region100: #{conv_block_forward.2} parent=5 // pred_region
        %s1775 = ssub.s32 %s12, 2
        // Predicated region
        $region102: #{conv_block_forward.2} parent=100 // pred_check
          %p1776 = pneg %p146
        $region103: #{conv_block_forward.2} parent=100 // pred_check_branch
          %1778 = sbr.rel (%p1776) target = $region105
        $region104: #{conv_block_forward.2} parent=100 // pred_region
          %s1779 = sadd.s32 %s23, %s24
          %s1780 = smul.u32 14, %s1779
          %p1781 = scmp.lt.s32.totalorder %s1780, 27
          %s1782 = scalar_select %p1781, %s1780, 27
          %s1783 = smul.addr %s1782, 4
          %s1784 = scalar_lea.vmem %s4, %s1783
        $region105: #{conv_block_forward.2} parent=100 // pred_fallthru
          _
        // Predicated region
        $region106: #{conv_block_forward.2} parent=100 // pred_check
          %p1785 = pneg %p172
        $region107: #{conv_block_forward.2} parent=100 // pred_check_branch
          %1787 = sbr.rel (%p1785) target = $region109
        $region108: #{conv_block_forward.2} parent=100 // pred_region
          %p1788 = scmp.lt.s32.totalorder %s23, 1
          %s1789 = scalar_select %p1788, %s23, 1
          %s1790 = smul.addr %s1789, 2
          %s1791 = scalar_lea.vmem %s5, %s1790
        $region109: #{conv_block_forward.2} parent=100 // pred_fallthru
          _
      $region101: #{conv_block_forward.2} parent=5 // pred_fallthru
        _
    $region6: #{conv_block_forward.2} parent=1 // loop_footer
      %s16 = sadd.s32 1, %s12
    $region7: #{conv_block_forward.2} parent=1 // loop_footer_branch
      %11 = sbr.rel target = $region3
    $region8: #{conv_block_forward.2} parent=1 // loop_exit
      _

</llo_original>
